<compile_context>
chip_gen: v5e
topology: v5e:2x2
jax: 0.10.0
libtpu: 0.0.40
codegen_flags: <defaults>
</compile_context>

<pallas_src>
import math

import jax
import jax.numpy as jnp
from jax import lax
from jax.experimental import pallas as pl
from jax.experimental.pallas import tpu as pltpu

# ---- small synthetic config (consistent with the module's __init__) ----
B = 2            # batch
S = 8            # sequence length
H = 32           # hidden_size
NH = 4           # num_attention_heads
HD = H // NH     # attention_head_size
I = 64           # intermediate_size
NUM_LAYERS = 2   # num_hidden_layers
REL_POS_BINS = 32
MAX_REL_POS = 128
REL_POS_TYPE = 2          # exercise the rel_pos branch
LN_EPS = 1e-5

# matmul-operand dtype: bf16 operands + f32 accumulation keeps the MXU on its
# fast path on v6e/v7x.  Use jnp.float32 for exact f32 math.
COMPUTE_DTYPE = jnp.bfloat16


def _gelu(x):
    # erf-GELU, matching the module's `gelu` (kept exact; tanh-approx optional)
    return x * 0.5 * (1.0 + lax.erf(x / math.sqrt(2.0)))


def _layer_norm(x, gamma, beta, eps=LN_EPS):
    mean = jnp.mean(x, axis=-1, keepdims=True)
    var = jnp.mean(jnp.square(x - mean), axis=-1, keepdims=True)
    return (x - mean) * lax.rsqrt(var + eps) * gamma + beta


def _mm(x, w):
    # x: f32 activations; w: pre-transposed [in, out] weight in COMPUTE_DTYPE.
    return jnp.dot(x.astype(w.dtype), w, preferred_element_type=jnp.float32)


# ---------------------------------------------------------------------------
# Pallas kernel: whole encoder stack.  grid = (B, NUM_LAYERS); the hidden state
# of the current batch block is carried between layers in a VMEM scratch.
# ---------------------------------------------------------------------------
def _make_encoder_kernel(with_probs, all_layers):
    def kernel(hid_ref, mask_ref, rel_ref,
               wq_ref, wk_ref, wv_ref, bq_ref, bk_ref, bv_ref,
               wo_ref, bo_ref, g1_ref, b1_ref,
               wi_ref, bi_ref, wo2_ref, bo2_ref, g2_ref, b2_ref,
               *outs_and_scratch):
        if with_probs:
            out_ref, probs_ref, hid_sc = outs_and_scratch
        else:
            out_ref, hid_sc = outs_and_scratch
            probs_ref = None

        layer = pl.program_id(1)

        # Layer 0: pull this batch block's hidden state into the VMEM scratch.
        @pl.when(layer == 0)
        def _():
            hid_sc[...] = hid_ref[0]

        x = hid_sc[...]                                    # (S, H) f32

        # ---- per-head Q/K/V projections as head-batched matmuls ----
        # weights are head-major (NH, H, HD); no lane slicing, no transposes.
        xb = jnp.broadcast_to(x.astype(COMPUTE_DTYPE)[None], (NH, S, H))
        q_h = jnp.einsum('nsh,nhd->nsd', xb, wq_ref[0],
                         preferred_element_type=jnp.float32) + bq_ref[0]
        k_h = jnp.einsum('nsh,nhd->nsd', xb, wk_ref[0],
                         preferred_element_type=jnp.float32) + bk_ref[0]
        v_h = jnp.einsum('nsh,nhd->nsd', xb, wv_ref[0],
                         preferred_element_type=jnp.float32) + bv_ref[0]

        # ---- attention scores + softmax (bias stays factored) ----
        scores = jnp.einsum('nqd,nkd->nqk',
                            q_h.astype(COMPUTE_DTYPE), k_h.astype(COMPUTE_DTYPE),
                            preferred_element_type=jnp.float32)     # (NH,S,S)
        scores = scores + rel_ref[...] + mask_ref[...]   # (NH,S,S)+(NH,S,S)+(1,1,S)
        scores = scores - jnp.max(scores, axis=-1, keepdims=True)
        e = jnp.exp(scores)
        denom = jnp.sum(e, axis=-1, keepdims=True)
        if with_probs:
            p = e / denom                       # exact: returned probs sum to 1
            probs_ref[0, 0] = p
        else:
            p = e * pl.reciprocal(denom, approx=True)      # EUP slot
        ctx = jnp.einsum('nqk,nkd->nqd',
                         p.astype(COMPUTE_DTYPE), v_h.astype(COMPUTE_DTYPE),
                         preferred_element_type=jnp.float32)        # (NH,S,HD)

        # ---- BertSelfOutput: head merge THROUGH the dense projection ----
        # per-head partial (NH, S, H), summed over heads == context @ Wo
        attn = jnp.einsum('nsd,ndh->nsh', ctx.astype(COMPUTE_DTYPE), wo_ref[0],
                          preferred_element_type=jnp.float32)
        attn = jnp.sum(attn, axis=0) + bo_ref[0]                    # (S, H)
        attn = _layer_norm(attn + x, g1_ref[0], b1_ref[0])

        # ---- BertIntermediate + BertOutput ----
        inter = _gelu(_mm(attn, wi_ref[0]) + bi_ref[0])
        out = _mm(inter, wo2_ref[0]) + bo2_ref[0]
        out = _layer_norm(out + attn, g2_ref[0], b2_ref[0])

        hid_sc[...] = out                  # carry to next layer (stays in VMEM)

        if all_layers:
            out_ref[0, 0] = out            # per-layer hidden output
        else:
            # only the final layer is consumed: single HBM writeback
            @pl.when(layer == pl.num_programs(1) - 1)
            def _():
                out_ref[0] = out

    return kernel


# ---------------------------------------------------------------------------
# Host-side weight packing + pallas_call wrapper.
# ---------------------------------------------------------------------------
_WEIGHT_NAMES = ('wq', 'wk', 'wv', 'bq', 'bk', 'bv',
                 'wo', 'bo', 'g1', 'b1', 'wi', 'bi', 'wo2', 'bo2', 'g2', 'b2')


def pack_encoder_params(params):
    """Once, host-side: per-head [in,out] Q/K/V weights (NH,H,HD), per-head
    output-projection rows (NH,HD,H), FFN weights transposed to [in,out],
    1/sqrt(HD) folded into Wq/bq, everything stacked over layers, matmul
    weights cast to COMPUTE_DTYPE."""
    scale = 1.0 / math.sqrt(HD)

    def head_in_out(w):     # torch layout (out,in) -> (NH, in, HD)
        return jnp.transpose(w.reshape(NH, HD, H), (0, 2, 1))

    per_layer = []
    for lw in params['layers']:
        per_layer.append(dict(
            wq=(head_in_out(lw['wq']) * scale).astype(COMPUTE_DTYPE),
            wk=head_in_out(lw['wk']).astype(COMPUTE_DTYPE),
            wv=head_in_out(lw['wv']).astype(COMPUTE_DTYPE),
            bq=(lw['bq'] * scale).reshape(NH, 1, HD).astype(jnp.float32),
            bk=lw['bk'].reshape(NH, 1, HD).astype(jnp.float32),
            bv=lw['bv'].reshape(NH, 1, HD).astype(jnp.float32),
            wo=lw['wo'].T.reshape(NH, HD, H).astype(COMPUTE_DTYPE),
            bo=lw['bo'], g1=lw['g1'], b1=lw['b1'],
            wi=lw['wi'].T.astype(COMPUTE_DTYPE), bi=lw['bi'],       # (H, I)
            wo2=lw['wo2'].T.astype(COMPUTE_DTYPE), bo2=lw['bo2'],   # (I, H)
            g2=lw['g2'], b2=lw['b2'],
        ))
    return {name: jnp.stack([lw[name] for lw in per_layer])
            for name in _WEIGHT_NAMES}


def _encoder_pallas(hidden, mask, rel_pos, packed,
                    output_attention, output_all_encoded_layers):
    weights = [packed[name] for name in _WEIGHT_NAMES]

    in_specs = [
        pl.BlockSpec((1, S, H), lambda b, l: (b, 0, 0)),        # hidden (input)
        pl.BlockSpec((1, 1, S), lambda b, l: (b, 0, 0)),        # additive mask
        pl.BlockSpec((NH, S, S), lambda b, l: (0, 0, 0)),       # rel_pos bias
    ] + [
        pl.BlockSpec((1,) + w.shape[1:],
                     lambda b, l, nd=w.ndim - 1: (l,) + (0,) * nd)
        for w in weights
    ]

    if output_all_encoded_layers:
        hid_out_spec = pl.BlockSpec((1, 1, S, H), lambda b, l: (l, b, 0, 0))
        hid_out_shape = jax.ShapeDtypeStruct((NUM_LAYERS, B, S, H), jnp.float32)
    else:
        hid_out_spec = pl.BlockSpec((1, S, H), lambda b, l: (b, 0, 0))
        hid_out_shape = jax.ShapeDtypeStruct((B, S, H), jnp.float32)

    if output_attention:
        out_specs = [hid_out_spec,
                     pl.BlockSpec((1, 1, NH, S, S),
                                  lambda b, l: (l, b, 0, 0, 0))]
        out_shape = [hid_out_shape,
                     jax.ShapeDtypeStruct((NUM_LAYERS, B, NH, S, S),
                                          jnp.float32)]
    else:
        out_specs = hid_out_spec
        out_shape = hid_out_shape

    return pl.pallas_call(
        _make_encoder_kernel(output_attention, output_all_encoded_layers),
        grid=(B, NUM_LAYERS),
        in_specs=in_specs,
        out_specs=out_specs,
        out_shape=out_shape,
        scratch_shapes=[pltpu.VMEM((S, H), jnp.float32)],
        compiler_params=pltpu.CompilerParams(
            # batch blocks are independent (megacore on v7x); layers are
            # sequentially dependent (hidden carried in the VMEM scratch).
            dimension_semantics=("parallel", "arbitrary"),
            vmem_limit_bytes=48 * 1024 * 1024),
    )(hidden, mask, rel_pos, *weights)


# ---------------------------------------------------------------------------
# Glue: relative position bucketing + rel_pos_bias (one_hot @ W.T == gather).
# ---------------------------------------------------------------------------
def relative_position_bucket(relative_position, bidirectional=True,
                             num_buckets=32, max_distance=128):
    ret = 0
    if bidirectional:
        num_buckets //= 2
        ret = (relative_position > 0).astype(jnp.int32) * num_buckets
        n = jnp.abs(relative_position)
    else:
        n = jnp.maximum(-relative_position, 0)
    max_exact = num_buckets // 2
    is_small = n < max_exact
    val_if_large = max_exact + (
        jnp.log(jnp.maximum(n, 1).astype(jnp.float32) / max_exact)
        / math.log(max_distance / max_exact)
        * (num_buckets - max_exact)
    ).astype(jnp.int32)
    val_if_large = jnp.minimum(val_if_large, num_buckets - 1)
    return ret + jnp.where(is_small, n, val_if_large)


def bert_encoder_forward(hidden, attention_mask, position_ids, params,
                         output_all_encoded_layers=True, output_attention=False):
    mask = attention_mask.reshape(B, 1, S).astype(jnp.float32)

    if REL_POS_TYPE in (1, 2):
        # TODO(synk): rel_pos is built from position_ids[0] (shared arange in
        # this model); distinct per-batch position_ids would need a
        # batch-indexed (B, NH, S, S) rel_pos BlockSpec instead.
        pos = position_ids[0]
        rel_pos_mat = pos[None, :] - pos[:, None]                      # (S, S)
        buckets = relative_position_bucket(
            rel_pos_mat, num_buckets=REL_POS_BINS, max_distance=MAX_REL_POS)
        # F.one_hot(buckets) @ rel_pos_bias.weight.T  ==  row gather of W.T
        rel = jnp.take(params['rel_pos_bias'].T, buckets, axis=0)      # (S,S,NH)
        rel_pos = jnp.transpose(rel, (2, 0, 1)).astype(jnp.float32)    # (NH,S,S)
    else:
        rel_pos = jnp.zeros((NH, S, S), jnp.float32)

    packed = pack_encoder_params(params)
    res = _encoder_pallas(hidden.astype(jnp.float32), mask, rel_pos, packed,
                          output_attention, output_all_encoded_layers)
    if output_attention:
        all_hidden, all_probs = res
    else:
        all_hidden, all_probs = res, None

    if output_all_encoded_layers:
        all_encoder_layers = [all_hidden[l] for l in range(NUM_LAYERS)]
    else:
        all_encoder_layers = [all_hidden]          # final layer only

    all_encoder_attention_probs = []
    if output_attention:
        all_encoder_attention_probs = [all_probs[l] for l in range(NUM_LAYERS)]
    return all_encoder_layers, all_encoder_attention_probs


# ---------------------------------------------------------------------------
# Deterministic parameter init (synthetic, mirrors module __init__ shapes;
# PyTorch layout W:[out, in] — packing transposes once on the host).
# ---------------------------------------------------------------------------
def init_params(key):
    def nrm(k, shape, scale=0.02):
        return (scale * jax.random.normal(k, shape)).astype(jnp.float32)

    keys = jax.random.split(key, NUM_LAYERS + 1)
    layers = []
    for li in range(NUM_LAYERS):
        ks = jax.random.split(keys[li], 8)
        layers.append(dict(
            wq=nrm(ks[0], (H, H)),  bq=jnp.zeros((1, H), jnp.float32),
            wk=nrm(ks[1], (H, H)),  bk=jnp.zeros((1, H), jnp.float32),
            wv=nrm(ks[2], (H, H)),  bv=jnp.zeros((1, H), jnp.float32),
            wo=nrm(ks[3], (H, H)),  bo=jnp.zeros((1, H), jnp.float32),
            g1=jnp.ones((1, H), jnp.float32), b1=jnp.zeros((1, H), jnp.float32),
            wi=nrm(ks[4], (I, H)),  bi=jnp.zeros((1, I), jnp.float32),
            wo2=nrm(ks[5], (H, I)), bo2=jnp.zeros((1, H), jnp.float32),
            g2=jnp.ones((1, H), jnp.float32), b2=jnp.zeros((1, H), jnp.float32),
        ))
    rel_pos_bias = nrm(keys[-1], (NH, REL_POS_BINS))  # nn.Linear(bins, NH, bias=False)
    return dict(layers=layers, rel_pos_bias=rel_pos_bias)


if __name__ == "__main__":
    key = jax.random.PRNGKey(0)
    k_in, k_par = jax.random.split(key)

    hidden = jax.random.normal(k_in, (B, S, H), dtype=jnp.float32)
    position_ids = jnp.broadcast_to(jnp.arange(S, dtype=jnp.int32), (B, S))

    # additive attention mask: 0 where attended, -10000 where masked
    valid = jnp.ones((B, S), dtype=jnp.float32).at[1, -2:].set(0.0)
    attention_mask = ((1.0 - valid) * -10000.0)[:, None, :]   # (B, 1, S)

    params = init_params(k_par)

    # default path: all encoded layers, no attention-probs output
    all_layers, _ = bert_encoder_forward(hidden, attention_mask, position_ids,
                                         params)
    final = jax.block_until_ready(all_layers[-1])
    assert final.shape == (B, S, H)
    assert len(all_layers) == NUM_LAYERS

    # final-layer-only + attention-probs variant (separate kernel instance)
    layers2, probs = bert_encoder_forward(hidden, attention_mask, position_ids,
                                          params,
                                          output_all_encoded_layers=False,
                                          output_attention=True)
    jax.block_until_ready(layers2[-1])
    assert len(layers2) == 1 and layers2[0].shape == (B, S, H)
    assert len(probs) == NUM_LAYERS and probs[0].shape == (B, NH, S, S)

    print("KERNEL_OK")
</pallas_src>

<mosaic_0001>
module attributes {stable_mosaic.version = 11 : i64} {
  func.func @kernel(%arg0: i32, %arg1: i32, %arg2: memref<1x8x32xf32, #tpu.memory_space<vmem>>, %arg3: memref<1x1x8xf32, #tpu.memory_space<vmem>>, %arg4: memref<4x8x8xf32, #tpu.memory_space<vmem>>, %arg5: memref<1x4x32x8xbf16, #tpu.memory_space<vmem>>, %arg6: memref<1x4x32x8xbf16, #tpu.memory_space<vmem>>, %arg7: memref<1x4x32x8xbf16, #tpu.memory_space<vmem>>, %arg8: memref<1x4x1x8xf32, #tpu.memory_space<vmem>>, %arg9: memref<1x4x1x8xf32, #tpu.memory_space<vmem>>, %arg10: memref<1x4x1x8xf32, #tpu.memory_space<vmem>>, %arg11: memref<1x4x8x32xbf16, #tpu.memory_space<vmem>>, %arg12: memref<1x1x32xf32, #tpu.memory_space<vmem>>, %arg13: memref<1x1x32xf32, #tpu.memory_space<vmem>>, %arg14: memref<1x1x32xf32, #tpu.memory_space<vmem>>, %arg15: memref<1x32x64xbf16, #tpu.memory_space<vmem>>, %arg16: memref<1x1x64xf32, #tpu.memory_space<vmem>>, %arg17: memref<1x64x32xbf16, #tpu.memory_space<vmem>>, %arg18: memref<1x1x32xf32, #tpu.memory_space<vmem>>, %arg19: memref<1x1x32xf32, #tpu.memory_space<vmem>>, %arg20: memref<1x1x32xf32, #tpu.memory_space<vmem>>, %arg21: memref<1x1x8x32xf32, #tpu.memory_space<vmem>>, %arg22: memref<8x32xf32, #tpu.memory_space<vmem>>) attributes {dimension_semantics = [#tpu.dimension_semantics<parallel>, #tpu.dimension_semantics<arbitrary>], iteration_bounds = array<i64: 2, 2>, scalar_prefetch = 0 : i64, scratch_operands = 1 : i64, tpu.core_type = #tpu.core_type<tc>, window_params = [{transform_indices = @transform_0, window_bounds = array<i64: 1, 8, 32>}, {transform_indices = @transform_1, window_bounds = array<i64: 1, 1, 8>}, {pipeline_mode = #tpu.pipeline_mode<synchronous>, transform_indices = @transform_2, window_bounds = array<i64: 4, 8, 8>}, {transform_indices = @transform_3, window_bounds = array<i64: 1, 4, 32, 8>}, {transform_indices = @transform_4, window_bounds = array<i64: 1, 4, 32, 8>}, {transform_indices = @transform_5, window_bounds = array<i64: 1, 4, 32, 8>}, {transform_indices = @transform_6, window_bounds = array<i64: 1, 4, 1, 8>}, {transform_indices = @transform_7, window_bounds = array<i64: 1, 4, 1, 8>}, {transform_indices = @transform_8, window_bounds = array<i64: 1, 4, 1, 8>}, {transform_indices = @transform_9, window_bounds = array<i64: 1, 4, 8, 32>}, {transform_indices = @transform_10, window_bounds = array<i64: 1, 1, 32>}, {transform_indices = @transform_11, window_bounds = array<i64: 1, 1, 32>}, {transform_indices = @transform_12, window_bounds = array<i64: 1, 1, 32>}, {transform_indices = @transform_13, window_bounds = array<i64: 1, 32, 64>}, {transform_indices = @transform_14, window_bounds = array<i64: 1, 1, 64>}, {transform_indices = @transform_15, window_bounds = array<i64: 1, 64, 32>}, {transform_indices = @transform_16, window_bounds = array<i64: 1, 1, 32>}, {transform_indices = @transform_17, window_bounds = array<i64: 1, 1, 32>}, {transform_indices = @transform_18, window_bounds = array<i64: 1, 1, 32>}, {transform_indices = @transform_19, window_bounds = array<i64: 1, 1, 8, 32>}]} {
    %c0_i32 = arith.constant 0 : i32
    %0 = arith.cmpi eq, %arg1, %c0_i32 : i32
    %1 = arith.extui %0 : i1 to i32
    %c0_i32_0 = arith.constant 0 : i32
    %2 = arith.cmpi ne, %1, %c0_i32_0 : i32
    scf.if %2 {
      %c0_92 = arith.constant 0 : index
      %c0_93 = arith.constant 0 : index
      %c0_94 = arith.constant 0 : index
      %141 = vector.load %arg2[%c0_92, %c0_93, %c0_94] : memref<1x8x32xf32, #tpu.memory_space<vmem>>, vector<1x8x32xf32>
      %142 = vector.shape_cast %141 : vector<1x8x32xf32> to vector<8x32xf32>
      %c0_95 = arith.constant 0 : index
      %c0_96 = arith.constant 0 : index
      %143 = vector.load %arg22[%c0_95, %c0_96] : memref<8x32xf32, #tpu.memory_space<vmem>>, vector<8x32xf32>
      tpu.vector_store %arg22[%c0_95, %c0_96], %142 {strides = array<i32>} : memref<8x32xf32, #tpu.memory_space<vmem>>, vector<8x32xf32>,
    } else {
    }
    %c0 = arith.constant 0 : index
    %c0_1 = arith.constant 0 : index
    %3 = vector.load %arg22[%c0, %c0_1] : memref<8x32xf32, #tpu.memory_space<vmem>>, vector<8x32xf32>
    %4 = arith.truncf %3 : vector<8x32xf32> to vector<8x32xbf16>
    %5 = vector.shape_cast %4 : vector<8x32xbf16> to vector<1x8x32xbf16>
    %6 = vector.shape_cast %5 : vector<1x8x32xbf16> to vector<1x8x32xbf16>
    %7 = vector.broadcast %6 : vector<1x8x32xbf16> to vector<4x8x32xbf16>
    %c0_2 = arith.constant 0 : index
    %c0_3 = arith.constant 0 : index
    %c0_4 = arith.constant 0 : index
    %c0_5 = arith.constant 0 : index
    %8 = vector.load %arg5[%c0_2, %c0_3, %c0_4, %c0_5] : memref<1x4x32x8xbf16, #tpu.memory_space<vmem>>, vector<1x4x32x8xbf16>
    %9 = vector.shape_cast %8 : vector<1x4x32x8xbf16> to vector<4x32x8xbf16>
    "tpu.trace_start"() <{level = 10 : i32, message = "nsh,nhd->nsd"}> : () -> ()
    %cst = arith.constant dense<0.000000e+00> : vector<4x8x8xf32>
    %10 = tpu.matmul %7, %9, %cst {dimension_numbers = #tpu.dot_dimension_numbers<[2], [1], [1], [2], [0, 0, 0, 1, 1, 2], [0], [0]>} : vector<4x8x32xbf16>, vector<4x32x8xbf16>, vector<4x8x8xf32> -> vector<4x8x8xf32>
    "tpu.trace_stop"() : () -> ()
    %c0_6 = arith.constant 0 : index
    %c0_7 = arith.constant 0 : index
    %c0_8 = arith.constant 0 : index
    %c0_9 = arith.constant 0 : index
    %11 = vector.load %arg8[%c0_6, %c0_7, %c0_8, %c0_9] : memref<1x4x1x8xf32, #tpu.memory_space<vmem>>, vector<1x4x1x8xf32>
    %12 = vector.shape_cast %11 : vector<1x4x1x8xf32> to vector<4x1x8xf32>
    %13 = vector.broadcast %12 : vector<4x1x8xf32> to vector<4x8x8xf32>
    %14 = arith.addf %10, %13 : vector<4x8x8xf32>
    %c0_10 = arith.constant 0 : index
    %c0_11 = arith.constant 0 : index
    %c0_12 = arith.constant 0 : index
    %c0_13 = arith.constant 0 : index
    %15 = vector.load %arg6[%c0_10, %c0_11, %c0_12, %c0_13] : memref<1x4x32x8xbf16, #tpu.memory_space<vmem>>, vector<1x4x32x8xbf16>
    %16 = vector.shape_cast %15 : vector<1x4x32x8xbf16> to vector<4x32x8xbf16>
    "tpu.trace_start"() <{level = 10 : i32, message = "nsh,nhd->nsd"}> : () -> ()
    %cst_14 = arith.constant dense<0.000000e+00> : vector<4x8x8xf32>
    %17 = tpu.matmul %7, %16, %cst_14 {dimension_numbers = #tpu.dot_dimension_numbers<[2], [1], [1], [2], [0, 0, 0, 1, 1, 2], [0], [0]>} : vector<4x8x32xbf16>, vector<4x32x8xbf16>, vector<4x8x8xf32> -> vector<4x8x8xf32>
    "tpu.trace_stop"() : () -> ()
    %c0_15 = arith.constant 0 : index
    %c0_16 = arith.constant 0 : index
    %c0_17 = arith.constant 0 : index
    %c0_18 = arith.constant 0 : index
    %18 = vector.load %arg9[%c0_15, %c0_16, %c0_17, %c0_18] : memref<1x4x1x8xf32, #tpu.memory_space<vmem>>, vector<1x4x1x8xf32>
    %19 = vector.shape_cast %18 : vector<1x4x1x8xf32> to vector<4x1x8xf32>
    %20 = vector.broadcast %19 : vector<4x1x8xf32> to vector<4x8x8xf32>
    %21 = arith.addf %17, %20 : vector<4x8x8xf32>
    %c0_19 = arith.constant 0 : index
    %c0_20 = arith.constant 0 : index
    %c0_21 = arith.constant 0 : index
    %c0_22 = arith.constant 0 : index
    %22 = vector.load %arg7[%c0_19, %c0_20, %c0_21, %c0_22] : memref<1x4x32x8xbf16, #tpu.memory_space<vmem>>, vector<1x4x32x8xbf16>
    %23 = vector.shape_cast %22 : vector<1x4x32x8xbf16> to vector<4x32x8xbf16>
    "tpu.trace_start"() <{level = 10 : i32, message = "nsh,nhd->nsd"}> : () -> ()
    %cst_23 = arith.constant dense<0.000000e+00> : vector<4x8x8xf32>
    %24 = tpu.matmul %7, %23, %cst_23 {dimension_numbers = #tpu.dot_dimension_numbers<[2], [1], [1], [2], [0, 0, 0, 1, 1, 2], [0], [0]>} : vector<4x8x32xbf16>, vector<4x32x8xbf16>, vector<4x8x8xf32> -> vector<4x8x8xf32>
    "tpu.trace_stop"() : () -> ()
    %c0_24 = arith.constant 0 : index
    %c0_25 = arith.constant 0 : index
    %c0_26 = arith.constant 0 : index
    %c0_27 = arith.constant 0 : index
    %25 = vector.load %arg10[%c0_24, %c0_25, %c0_26, %c0_27] : memref<1x4x1x8xf32, #tpu.memory_space<vmem>>, vector<1x4x1x8xf32>
    %26 = vector.shape_cast %25 : vector<1x4x1x8xf32> to vector<4x1x8xf32>
    %27 = vector.broadcast %26 : vector<4x1x8xf32> to vector<4x8x8xf32>
    %28 = arith.addf %24, %27 : vector<4x8x8xf32>
    %29 = arith.truncf %14 : vector<4x8x8xf32> to vector<4x8x8xbf16>
    %30 = arith.truncf %21 : vector<4x8x8xf32> to vector<4x8x8xbf16>
    "tpu.trace_start"() <{level = 10 : i32, message = "nqd,nkd->nqk"}> : () -> ()
    %cst_28 = arith.constant dense<0.000000e+00> : vector<4x8x8xf32>
    %31 = tpu.matmul %29, %30, %cst_28 {dimension_numbers = #tpu.dot_dimension_numbers<[2], [2], [1], [1], [0, 0, 0, 1, 1, 1], [0], [0]>} : vector<4x8x8xbf16>, vector<4x8x8xbf16>, vector<4x8x8xf32> -> vector<4x8x8xf32>
    "tpu.trace_stop"() : () -> ()
    %c0_29 = arith.constant 0 : index
    %c0_30 = arith.constant 0 : index
    %c0_31 = arith.constant 0 : index
    %32 = vector.load %arg4[%c0_29, %c0_30, %c0_31] : memref<4x8x8xf32, #tpu.memory_space<vmem>>, vector<4x8x8xf32>
    %33 = arith.addf %31, %32 : vector<4x8x8xf32>
    %c0_32 = arith.constant 0 : index
    %c0_33 = arith.constant 0 : index
    %c0_34 = arith.constant 0 : index
    %34 = vector.load %arg3[%c0_32, %c0_33, %c0_34] : memref<1x1x8xf32, #tpu.memory_space<vmem>>, vector<1x1x8xf32>
    %35 = vector.broadcast %34 : vector<1x1x8xf32> to vector<4x8x8xf32>
    %36 = arith.addf %33, %35 : vector<4x8x8xf32>
    %cst_35 = arith.constant dense<0xFF800000> : vector<4x8xf32>
    %37 = vector.multi_reduction <maximumf>, %36, %cst_35 [2] : vector<4x8x8xf32> to vector<4x8xf32>
    %38 = vector.shape_cast %37 : vector<4x8xf32> to vector<4x8x1xf32>
    %39 = vector.broadcast %38 : vector<4x8x1xf32> to vector<4x8x8xf32>
    %40 = arith.subf %36, %39 : vector<4x8x8xf32>
    %41 = math.exp %40 : vector<4x8x8xf32>
    %cst_36 = arith.constant dense<0.000000e+00> : vector<4x8xf32>
    %42 = vector.multi_reduction <add>, %41, %cst_36 [2] : vector<4x8x8xf32> to vector<4x8xf32>
    %43 = vector.shape_cast %42 : vector<4x8xf32> to vector<4x8x1xf32>
    %44 = tpu.reciprocal %43 {approx = true} : vector<4x8x1xf32> -> vector<4x8x1xf32>
    %45 = vector.broadcast %44 : vector<4x8x1xf32> to vector<4x8x8xf32>
    %46 = arith.mulf %41, %45 : vector<4x8x8xf32>
    %47 = arith.truncf %46 : vector<4x8x8xf32> to vector<4x8x8xbf16>
    %48 = arith.truncf %28 : vector<4x8x8xf32> to vector<4x8x8xbf16>
    "tpu.trace_start"() <{level = 10 : i32, message = "nqk,nkd->nqd"}> : () -> ()
    %cst_37 = arith.constant dense<0.000000e+00> : vector<4x8x8xf32>
    %49 = tpu.matmul %47, %48, %cst_37 {dimension_numbers = #tpu.dot_dimension_numbers<[2], [1], [1], [2], [0, 0, 0, 1, 1, 2], [0], [0]>} : vector<4x8x8xbf16>, vector<4x8x8xbf16>, vector<4x8x8xf32> -> vector<4x8x8xf32>
    "tpu.trace_stop"() : () -> ()
    %50 = arith.truncf %49 : vector<4x8x8xf32> to vector<4x8x8xbf16>
    %c0_38 = arith.constant 0 : index
    %c0_39 = arith.constant 0 : index
    %c0_40 = arith.constant 0 : index
    %c0_41 = arith.constant 0 : index
    %51 = vector.load %arg11[%c0_38, %c0_39, %c0_40, %c0_41] : memref<1x4x8x32xbf16, #tpu.memory_space<vmem>>, vector<1x4x8x32xbf16>
    %52 = vector.shape_cast %51 : vector<1x4x8x32xbf16> to vector<4x8x32xbf16>
    "tpu.trace_start"() <{level = 10 : i32, message = "nsd,ndh->nsh"}> : () -> ()
    %cst_42 = arith.constant dense<0.000000e+00> : vector<4x8x32xf32>
    %53 = tpu.matmul %50, %52, %cst_42 {dimension_numbers = #tpu.dot_dimension_numbers<[2], [1], [1], [2], [0, 0, 0, 1, 1, 2], [0], [0]>} : vector<4x8x8xbf16>, vector<4x8x32xbf16>, vector<4x8x32xf32> -> vector<4x8x32xf32>
    "tpu.trace_stop"() : () -> ()
    %cst_43 = arith.constant dense<0.000000e+00> : vector<8x32xf32>
    %54 = vector.multi_reduction <add>, %53, %cst_43 [0] : vector<4x8x32xf32> to vector<8x32xf32>
    %c0_44 = arith.constant 0 : index
    %c0_45 = arith.constant 0 : index
    %c0_46 = arith.constant 0 : index
    %55 = vector.load %arg12[%c0_44, %c0_45, %c0_46] : memref<1x1x32xf32, #tpu.memory_space<vmem>>, vector<1x1x32xf32>
    %56 = vector.shape_cast %55 : vector<1x1x32xf32> to vector<1x32xf32>
    %57 = vector.broadcast %56 : vector<1x32xf32> to vector<8x32xf32>
    %58 = arith.addf %54, %57 : vector<8x32xf32>
    %59 = arith.addf %58, %3 : vector<8x32xf32>
    %c0_47 = arith.constant 0 : index
    %c0_48 = arith.constant 0 : index
    %c0_49 = arith.constant 0 : index
    %60 = vector.load %arg13[%c0_47, %c0_48, %c0_49] : memref<1x1x32xf32, #tpu.memory_space<vmem>>, vector<1x1x32xf32>
    %61 = vector.shape_cast %60 : vector<1x1x32xf32> to vector<1x32xf32>
    %c0_50 = arith.constant 0 : index
    %c0_51 = arith.constant 0 : index
    %c0_52 = arith.constant 0 : index
    %62 = vector.load %arg14[%c0_50, %c0_51, %c0_52] : memref<1x1x32xf32, #tpu.memory_space<vmem>>, vector<1x1x32xf32>
    %63 = vector.shape_cast %62 : vector<1x1x32xf32> to vector<1x32xf32>
    %cst_53 = arith.constant dense<0.000000e+00> : vector<8xf32>
    %64 = vector.multi_reduction <add>, %59, %cst_53 [1] : vector<8x32xf32> to vector<8xf32>
    %65 = vector.shape_cast %64 : vector<8xf32> to vector<8x1xf32>
    %cst_54 = arith.constant 3.200000e+01 : f32
    %66 = vector.broadcast %cst_54 : f32 to vector<8x1xf32>
    %67 = arith.divf %65, %66 : vector<8x1xf32>
    %68 = vector.broadcast %67 : vector<8x1xf32> to vector<8x32xf32>
    %69 = arith.subf %59, %68 : vector<8x32xf32>
    %70 = arith.mulf %69, %69 : vector<8x32xf32>
    %cst_55 = arith.constant dense<0.000000e+00> : vector<8xf32>
    %71 = vector.multi_reduction <add>, %70, %cst_55 [1] : vector<8x32xf32> to vector<8xf32>
    %72 = vector.shape_cast %71 : vector<8xf32> to vector<8x1xf32>
    %cst_56 = arith.constant 3.200000e+01 : f32
    %73 = vector.broadcast %cst_56 : f32 to vector<8x1xf32>
    %74 = arith.divf %72, %73 : vector<8x1xf32>
    %75 = vector.broadcast %67 : vector<8x1xf32> to vector<8x32xf32>
    %76 = arith.subf %59, %75 : vector<8x32xf32>
    %cst_57 = arith.constant 9.99999974E-6 : f32
    %77 = vector.broadcast %cst_57 : f32 to vector<8x1xf32>
    %78 = arith.addf %74, %77 : vector<8x1xf32>
    %79 = math.rsqrt %78 : vector<8x1xf32>
    %80 = vector.broadcast %79 : vector<8x1xf32> to vector<8x32xf32>
    %81 = arith.mulf %76, %80 : vector<8x32xf32>
    %82 = vector.broadcast %61 : vector<1x32xf32> to vector<8x32xf32>
    %83 = arith.mulf %81, %82 : vector<8x32xf32>
    %84 = vector.broadcast %63 : vector<1x32xf32> to vector<8x32xf32>
    %85 = arith.addf %83, %84 : vector<8x32xf32>
    %c0_58 = arith.constant 0 : index
    %c0_59 = arith.constant 0 : index
    %c0_60 = arith.constant 0 : index
    %86 = vector.load %arg15[%c0_58, %c0_59, %c0_60] : memref<1x32x64xbf16, #tpu.memory_space<vmem>>, vector<1x32x64xbf16>
    %87 = vector.shape_cast %86 : vector<1x32x64xbf16> to vector<32x64xbf16>
    %88 = arith.truncf %85 : vector<8x32xf32> to vector<8x32xbf16>
    %cst_61 = arith.constant dense<0.000000e+00> : vector<8x64xf32>
    %89 = tpu.matmul %88, %87, %cst_61 {dimension_numbers = #tpu.dot_dimension_numbers<[1], [0], [0], [1], [0, 0, 1, 1], [], []>} : vector<8x32xbf16>, vector<32x64xbf16>, vector<8x64xf32> -> vector<8x64xf32>
    %c0_62 = arith.constant 0 : index
    %c0_63 = arith.constant 0 : index
    %c0_64 = arith.constant 0 : index
    %90 = vector.load %arg16[%c0_62, %c0_63, %c0_64] : memref<1x1x64xf32, #tpu.memory_space<vmem>>, vector<1x1x64xf32>
    %91 = vector.shape_cast %90 : vector<1x1x64xf32> to vector<1x64xf32>
    %92 = vector.broadcast %91 : vector<1x64xf32> to vector<8x64xf32>
    %93 = arith.addf %89, %92 : vector<8x64xf32>
    %cst_65 = arith.constant 5.000000e-01 : f32
    %94 = vector.broadcast %cst_65 : f32 to vector<8x64xf32>
    %95 = arith.mulf %93, %94 : vector<8x64xf32>
    %cst_66 = arith.constant 1.41421354 : f32
    %96 = vector.broadcast %cst_66 : f32 to vector<8x64xf32>
    %97 = arith.divf %93, %96 : vector<8x64xf32>
    %98 = math.erf %97 : vector<8x64xf32>
    %cst_67 = arith.constant 1.000000e+00 : f32
    %99 = vector.broadcast %cst_67 : f32 to vector<8x64xf32>
    %100 = arith.addf %99, %98 : vector<8x64xf32>
    %101 = arith.mulf %95, %100 : vector<8x64xf32>
    %c0_68 = arith.constant 0 : index
    %c0_69 = arith.constant 0 : index
    %c0_70 = arith.constant 0 : index
    %102 = vector.load %arg17[%c0_68, %c0_69, %c0_70] : memref<1x64x32xbf16, #tpu.memory_space<vmem>>, vector<1x64x32xbf16>
    %103 = vector.shape_cast %102 : vector<1x64x32xbf16> to vector<64x32xbf16>
    %104 = arith.truncf %101 : vector<8x64xf32> to vector<8x64xbf16>
    %cst_71 = arith.constant dense<0.000000e+00> : vector<8x32xf32>
    %105 = tpu.matmul %104, %103, %cst_71 {dimension_numbers = #tpu.dot_dimension_numbers<[1], [0], [0], [1], [0, 0, 1, 1], [], []>} : vector<8x64xbf16>, vector<64x32xbf16>, vector<8x32xf32> -> vector<8x32xf32>
    %c0_72 = arith.constant 0 : index
    %c0_73 = arith.constant 0 : index
    %c0_74 = arith.constant 0 : index
    %106 = vector.load %arg18[%c0_72, %c0_73, %c0_74] : memref<1x1x32xf32, #tpu.memory_space<vmem>>, vector<1x1x32xf32>
    %107 = vector.shape_cast %106 : vector<1x1x32xf32> to vector<1x32xf32>
    %108 = vector.broadcast %107 : vector<1x32xf32> to vector<8x32xf32>
    %109 = arith.addf %105, %108 : vector<8x32xf32>
    %110 = arith.addf %109, %85 : vector<8x32xf32>
    %c0_75 = arith.constant 0 : index
    %c0_76 = arith.constant 0 : index
    %c0_77 = arith.constant 0 : index
    %111 = vector.load %arg19[%c0_75, %c0_76, %c0_77] : memref<1x1x32xf32, #tpu.memory_space<vmem>>, vector<1x1x32xf32>
    %112 = vector.shape_cast %111 : vector<1x1x32xf32> to vector<1x32xf32>
    %c0_78 = arith.constant 0 : index
    %c0_79 = arith.constant 0 : index
    %c0_80 = arith.constant 0 : index
    %113 = vector.load %arg20[%c0_78, %c0_79, %c0_80] : memref<1x1x32xf32, #tpu.memory_space<vmem>>, vector<1x1x32xf32>
    %114 = vector.shape_cast %113 : vector<1x1x32xf32> to vector<1x32xf32>
    %cst_81 = arith.constant dense<0.000000e+00> : vector<8xf32>
    %115 = vector.multi_reduction <add>, %110, %cst_81 [1] : vector<8x32xf32> to vector<8xf32>
    %116 = vector.shape_cast %115 : vector<8xf32> to vector<8x1xf32>
    %cst_82 = arith.constant 3.200000e+01 : f32
    %117 = vector.broadcast %cst_82 : f32 to vector<8x1xf32>
    %118 = arith.divf %116, %117 : vector<8x1xf32>
    %119 = vector.broadcast %118 : vector<8x1xf32> to vector<8x32xf32>
    %120 = arith.subf %110, %119 : vector<8x32xf32>
    %121 = arith.mulf %120, %120 : vector<8x32xf32>
    %cst_83 = arith.constant dense<0.000000e+00> : vector<8xf32>
    %122 = vector.multi_reduction <add>, %121, %cst_83 [1] : vector<8x32xf32> to vector<8xf32>
    %123 = vector.shape_cast %122 : vector<8xf32> to vector<8x1xf32>
    %cst_84 = arith.constant 3.200000e+01 : f32
    %124 = vector.broadcast %cst_84 : f32 to vector<8x1xf32>
    %125 = arith.divf %123, %124 : vector<8x1xf32>
    %126 = vector.broadcast %118 : vector<8x1xf32> to vector<8x32xf32>
    %127 = arith.subf %110, %126 : vector<8x32xf32>
    %cst_85 = arith.constant 9.99999974E-6 : f32
    %128 = vector.broadcast %cst_85 : f32 to vector<8x1xf32>
    %129 = arith.addf %125, %128 : vector<8x1xf32>
    %130 = math.rsqrt %129 : vector<8x1xf32>
    %131 = vector.broadcast %130 : vector<8x1xf32> to vector<8x32xf32>
    %132 = arith.mulf %127, %131 : vector<8x32xf32>
    %133 = vector.broadcast %112 : vector<1x32xf32> to vector<8x32xf32>
    %134 = arith.mulf %132, %133 : vector<8x32xf32>
    %135 = vector.broadcast %114 : vector<1x32xf32> to vector<8x32xf32>
    %136 = arith.addf %134, %135 : vector<8x32xf32>
    %c0_86 = arith.constant 0 : index
    %c0_87 = arith.constant 0 : index
    %137 = vector.load %arg22[%c0_86, %c0_87] : memref<8x32xf32, #tpu.memory_space<vmem>>, vector<8x32xf32>
    tpu.vector_store %arg22[%c0_86, %c0_87], %136 {strides = array<i32>} : memref<8x32xf32, #tpu.memory_space<vmem>>, vector<8x32xf32>,
    %c0_88 = arith.constant 0 : index
    %c0_89 = arith.constant 0 : index
    %c0_90 = arith.constant 0 : index
    %c0_91 = arith.constant 0 : index
    %138 = vector.load %arg21[%c0_88, %c0_89, %c0_90, %c0_91] : memref<1x1x8x32xf32, #tpu.memory_space<vmem>>, vector<1x1x8x32xf32>
    %139 = vector.shape_cast %138 : vector<1x1x8x32xf32> to vector<8x32xf32>
    %140 = vector.shape_cast %136 : vector<8x32xf32> to vector<1x1x8x32xf32>
    tpu.vector_store %arg21[%c0_88, %c0_89, %c0_90, %c0_91], %140 {strides = array<i32>} : memref<1x1x8x32xf32, #tpu.memory_space<vmem>>, vector<1x1x8x32xf32>,
    return
  }
  func.func @transform_0(%arg0: i32, %arg1: i32) -> (i32, i32, i32) {
    %c0_i32 = arith.constant 0 : i32
    %c0_i32_0 = arith.constant 0 : i32
    %c0_i32_1 = arith.constant 0 : i32
    return %arg0, %c0_i32, %c0_i32_0 : i32, i32, i32
  }
  func.func @transform_1(%arg0: i32, %arg1: i32) -> (i32, i32, i32) {
    %c0_i32 = arith.constant 0 : i32
    %c0_i32_0 = arith.constant 0 : i32
    %c0_i32_1 = arith.constant 0 : i32
    return %arg0, %c0_i32, %c0_i32_0 : i32, i32, i32
  }
  func.func @transform_2(%arg0: i32, %arg1: i32) -> (i32, i32, i32) {
    %c0_i32 = arith.constant 0 : i32
    %c0_i32_0 = arith.constant 0 : i32
    %c0_i32_1 = arith.constant 0 : i32
    %c0_i32_2 = arith.constant 0 : i32
    return %c0_i32, %c0_i32_0, %c0_i32_1 : i32, i32, i32
  }
  func.func @transform_3(%arg0: i32, %arg1: i32) -> (i32, i32, i32, i32) {
    %c0_i32 = arith.constant 0 : i32
    %c0_i32_0 = arith.constant 0 : i32
    %c0_i32_1 = arith.constant 0 : i32
    %c0_i32_2 = arith.constant 0 : i32
    return %arg1, %c0_i32, %c0_i32_0, %c0_i32_1 : i32, i32, i32, i32
  }
  func.func @transform_4(%arg0: i32, %arg1: i32) -> (i32, i32, i32, i32) {
    %c0_i32 = arith.constant 0 : i32
    %c0_i32_0 = arith.constant 0 : i32
    %c0_i32_1 = arith.constant 0 : i32
    %c0_i32_2 = arith.constant 0 : i32
    return %arg1, %c0_i32, %c0_i32_0, %c0_i32_1 : i32, i32, i32, i32
  }
  func.func @transform_5(%arg0: i32, %arg1: i32) -> (i32, i32, i32, i32) {
    %c0_i32 = arith.constant 0 : i32
    %c0_i32_0 = arith.constant 0 : i32
    %c0_i32_1 = arith.constant 0 : i32
    %c0_i32_2 = arith.constant 0 : i32
    return %arg1, %c0_i32, %c0_i32_0, %c0_i32_1 : i32, i32, i32, i32
  }
  func.func @transform_6(%arg0: i32, %arg1: i32) -> (i32, i32, i32, i32) {
    %c0_i32 = arith.constant 0 : i32
    %c0_i32_0 = arith.constant 0 : i32
    %c0_i32_1 = arith.constant 0 : i32
    %c0_i32_2 = arith.constant 0 : i32
    return %arg1, %c0_i32, %c0_i32_0, %c0_i32_1 : i32, i32, i32, i32
  }
  func.func @transform_7(%arg0: i32, %arg1: i32) -> (i32, i32, i32, i32) {
    %c0_i32 = arith.constant 0 : i32
    %c0_i32_0 = arith.constant 0 : i32
    %c0_i32_1 = arith.constant 0 : i32
    %c0_i32_2 = arith.constant 0 : i32
    return %arg1, %c0_i32, %c0_i32_0, %c0_i32_1 : i32, i32, i32, i32
  }
  func.func @transform_8(%arg0: i32, %arg1: i32) -> (i32, i32, i32, i32) {
    %c0_i32 = arith.constant 0 : i32
    %c0_i32_0 = arith.constant 0 : i32
    %c0_i32_1 = arith.constant 0 : i32
    %c0_i32_2 = arith.constant 0 : i32
    return %arg1, %c0_i32, %c0_i32_0, %c0_i32_1 : i32, i32, i32, i32
  }
  func.func @transform_9(%arg0: i32, %arg1: i32) -> (i32, i32, i32, i32) {
    %c0_i32 = arith.constant 0 : i32
    %c0_i32_0 = arith.constant 0 : i32
    %c0_i32_1 = arith.constant 0 : i32
    %c0_i32_2 = arith.constant 0 : i32
    return %arg1, %c0_i32, %c0_i32_0, %c0_i32_1 : i32, i32, i32, i32
  }
  func.func @transform_10(%arg0: i32, %arg1: i32) -> (i32, i32, i32) {
    %c0_i32 = arith.constant 0 : i32
    %c0_i32_0 = arith.constant 0 : i32
    %c0_i32_1 = arith.constant 0 : i32
    return %arg1, %c0_i32, %c0_i32_0 : i32, i32, i32
  }
  func.func @transform_11(%arg0: i32, %arg1: i32) -> (i32, i32, i32) {
    %c0_i32 = arith.constant 0 : i32
    %c0_i32_0 = arith.constant 0 : i32
    %c0_i32_1 = arith.constant 0 : i32
    return %arg1, %c0_i32, %c0_i32_0 : i32, i32, i32
  }
  func.func @transform_12(%arg0: i32, %arg1: i32) -> (i32, i32, i32) {
    %c0_i32 = arith.constant 0 : i32
    %c0_i32_0 = arith.constant 0 : i32
    %c0_i32_1 = arith.constant 0 : i32
    return %arg1, %c0_i32, %c0_i32_0 : i32, i32, i32
  }
  func.func @transform_13(%arg0: i32, %arg1: i32) -> (i32, i32, i32) {
    %c0_i32 = arith.constant 0 : i32
    %c0_i32_0 = arith.constant 0 : i32
    %c0_i32_1 = arith.constant 0 : i32
    return %arg1, %c0_i32, %c0_i32_0 : i32, i32, i32
  }
  func.func @transform_14(%arg0: i32, %arg1: i32) -> (i32, i32, i32) {
    %c0_i32 = arith.constant 0 : i32
    %c0_i32_0 = arith.constant 0 : i32
    %c0_i32_1 = arith.constant 0 : i32
    return %arg1, %c0_i32, %c0_i32_0 : i32, i32, i32
  }
  func.func @transform_15(%arg0: i32, %arg1: i32) -> (i32, i32, i32) {
    %c0_i32 = arith.constant 0 : i32
    %c0_i32_0 = arith.constant 0 : i32
    %c0_i32_1 = arith.constant 0 : i32
    return %arg1, %c0_i32, %c0_i32_0 : i32, i32, i32
  }
  func.func @transform_16(%arg0: i32, %arg1: i32) -> (i32, i32, i32) {
    %c0_i32 = arith.constant 0 : i32
    %c0_i32_0 = arith.constant 0 : i32
    %c0_i32_1 = arith.constant 0 : i32
    return %arg1, %c0_i32, %c0_i32_0 : i32, i32, i32
  }
  func.func @transform_17(%arg0: i32, %arg1: i32) -> (i32, i32, i32) {
    %c0_i32 = arith.constant 0 : i32
    %c0_i32_0 = arith.constant 0 : i32
    %c0_i32_1 = arith.constant 0 : i32
    return %arg1, %c0_i32, %c0_i32_0 : i32, i32, i32
  }
  func.func @transform_18(%arg0: i32, %arg1: i32) -> (i32, i32, i32) {
    %c0_i32 = arith.constant 0 : i32
    %c0_i32_0 = arith.constant 0 : i32
    %c0_i32_1 = arith.constant 0 : i32
    return %arg1, %c0_i32, %c0_i32_0 : i32, i32, i32
  }
  func.func @transform_19(%arg0: i32, %arg1: i32) -> (i32, i32, i32, i32) {
    %c0_i32 = arith.constant 0 : i32
    %c0_i32_0 = arith.constant 0 : i32
    %c0_i32_1 = arith.constant 0 : i32
    return %arg1, %arg0, %c0_i32, %c0_i32_0 : i32, i32, i32, i32
  }
}

</mosaic_0001>

<llo_original>
// kernel: tpu_custom_call.1
$region0: #{tpu_custom_call.1}
  #allocation0 [shape = 'u32[]', space=smem, size = 0x4, offset = 0x4, fixed_abs, tag = 'smem constant byte address 0x4 - core index']
  #allocation1 [shape = 'u32[72,128]{1,0:T(1,128)}', space=vmem, size = 0x9000, scoped, tag = 'internal scratch']
  #allocation2 [shape = 'f32[8,32]{1,0:T(8,128)}', space=vmem, size = 0x1000, scoped, tag = 'scratch operand']
  %s0 = inlined_call_operand.vmem [shape: f32[2,8,32], index: 0, kind: input, shape index: {}]
  %s1 = inlined_call_operand.vmem [shape: f32[2,1,8], index: 1, kind: input, shape index: {}]
  %s2 = inlined_call_operand.vmem [shape: f32[4,8,8], index: 2, kind: input, shape index: {}]
  %s3 = inlined_call_operand.vmem [shape: bf16[2,4,32,8], index: 3, kind: input, shape index: {}]
  %s4 = inlined_call_operand.vmem [shape: bf16[2,4,32,8], index: 4, kind: input, shape index: {}]
  %s5 = inlined_call_operand.vmem [shape: bf16[2,4,32,8], index: 5, kind: input, shape index: {}]
  %s6 = inlined_call_operand.vmem [shape: f32[2,4,1,8], index: 6, kind: input, shape index: {}]
  %s7 = inlined_call_operand.vmem [shape: f32[2,4,1,8], index: 7, kind: input, shape index: {}]
  %s8 = inlined_call_operand.vmem [shape: f32[2,4,1,8], index: 8, kind: input, shape index: {}]
  %s9 = inlined_call_operand.vmem [shape: bf16[2,4,8,32], index: 9, kind: input, shape index: {}]
  %s10 = inlined_call_operand.vmem [shape: f32[2,1,32], index: 10, kind: input, shape index: {}]
  %s11 = inlined_call_operand.vmem [shape: f32[2,1,32], index: 11, kind: input, shape index: {}]
  %s12 = inlined_call_operand.vmem [shape: f32[2,1,32], index: 12, kind: input, shape index: {}]
  %s13 = inlined_call_operand.vmem [shape: bf16[2,32,64], index: 13, kind: input, shape index: {}]
  %s14 = inlined_call_operand.vmem [shape: f32[2,1,64], index: 14, kind: input, shape index: {}]
  %s15 = inlined_call_operand.vmem [shape: bf16[2,64,32], index: 15, kind: input, shape index: {}]
  %s16 = inlined_call_operand.vmem [shape: f32[2,1,32], index: 16, kind: input, shape index: {}]
  %s17 = inlined_call_operand.vmem [shape: f32[2,1,32], index: 17, kind: input, shape index: {}]
  %s18 = inlined_call_operand.vmem [shape: f32[2,1,32], index: 18, kind: input, shape index: {}]
  %s19 = inlined_call_operand.hbm [shape: f32[2,2,8,32], index: 19, kind: output, shape index: {}]
  %s20 = sld [smem:[#allocation0]]
  $region113: #{tpu_custom_call.1} parent=0
    _
  %s22 = ssub.s32 1, %s20
  %s23 = scalar_select 0, %s22, %s20
  $region1: #{tpu_custom_call.1} parent=0
    #allocation3 [shape = 'u8[8192]{0}', space=vmem, size = 0x2000, scoped, tag = 'output window, operand 0']
    #allocation4 [shape = 's32[2]{0}', space=sflag, size = 0x8, scoped, tag = 'scoped memory for tpu_custom_call.1']
    %24 = vsyncpa [#allocation4], 0
    %s25 = scalar_lea.sflag [#allocation4], 1
    %26 = vsyncpa %s25, 0
    loop: start=0, step=1, limit=6
    $region2: #{tpu_custom_call.1} parent=1 // loop_pre_header
      _
    $region3: #{tpu_custom_call.1} parent=1 // loop_header
      %s28 = sphi 0, %s32
      %p29 = scmp.ge.s32.totalorder %s28, 6
      %s35 = sphi 0, %s47
      %s36 = sphi 0, %s43
      %s37 = sphi 0, %s35
      %s38 = sphi 0, %s36
      %s39 = sphi 0, %s37
      %s40 = sphi 0, %s38
      %s50 = sphi 0, %s52
      %s53 = sphi 0, %s50
      %s54 = sphi 0, %s53
      %s70 = sphi 0, %s54
      %s76 = sphi 0, %s78
      %s79 = sphi 0, %s76
      %s80 = sphi 0, %s79
      %s96 = sphi 0, %s80
      %s100 = sphi 0, %s100
      %s102 = sphi 0, %s100
      %s103 = sphi 0, %s102
      %s117 = sphi 0, %s103
      %s123 = sphi 0, %s125
      %s126 = sphi 0, %s123
      %s127 = sphi 0, %s126
      %s143 = sphi 0, %s127
      %s149 = sphi 0, %s151
      %s152 = sphi 0, %s149
      %s153 = sphi 0, %s152
      %s169 = sphi 0, %s153
      %s175 = sphi 0, %s177
      %s178 = sphi 0, %s175
      %s179 = sphi 0, %s178
      %s195 = sphi 0, %s179
      %s201 = sphi 0, %s203
      %s204 = sphi 0, %s201
      %s205 = sphi 0, %s204
      %s221 = sphi 0, %s205
      %s227 = sphi 0, %s229
      %s230 = sphi 0, %s227
      %s231 = sphi 0, %s230
      %s247 = sphi 0, %s231
      %s253 = sphi 0, %s255
      %s256 = sphi 0, %s253
      %s257 = sphi 0, %s256
      %s273 = sphi 0, %s257
      %s279 = sphi 0, %s281
      %s282 = sphi 0, %s279
      %s283 = sphi 0, %s282
      %s299 = sphi 0, %s283
      %s305 = sphi 0, %s307
      %s308 = sphi 0, %s305
      %s309 = sphi 0, %s308
      %s325 = sphi 0, %s309
      %s331 = sphi 0, %s333
      %s334 = sphi 0, %s331
      %s335 = sphi 0, %s334
      %s351 = sphi 0, %s335
      %s357 = sphi 0, %s359
      %s360 = sphi 0, %s357
      %s361 = sphi 0, %s360
      %s377 = sphi 0, %s361
      %s383 = sphi 0, %s385
      %s386 = sphi 0, %s383
      %s387 = sphi 0, %s386
      %s403 = sphi 0, %s387
      %s409 = sphi 0, %s411
      %s412 = sphi 0, %s409
      %s413 = sphi 0, %s412
      %s429 = sphi 0, %s413
      %s435 = sphi 0, %s437
      %s438 = sphi 0, %s435
      %s439 = sphi 0, %s438
      %s455 = sphi 0, %s439
      %s461 = sphi 0, %s463
      %s464 = sphi 0, %s461
      %s465 = sphi 0, %s464
      %s481 = sphi 0, %s465
      %s487 = sphi 0, %s489
      %s490 = sphi 0, %s487
      %s491 = sphi 0, %s490
      %s507 = sphi 0, %s491
      %s513 = sphi 0, %s515
      %s516 = sphi 0, %s513
      %s517 = sphi 0, %s516
      %s533 = sphi 0, %s517
      %s541 = sphi 0, %s543
      %s544 = sphi 0, %s541
      %s545 = sphi 0, %s544
      %s561 = sphi 0, %s545
    $region4: #{tpu_custom_call.1} parent=1 // loop_header_branch
      %31 = sbr.rel (%p29) target = $region8
    $region5: #{tpu_custom_call.1} parent=1 // loop_body
      %s33 = ssub.s32 %s28, 1
      %s34 = ssub.s32 %s28, 2
      %s41 = sadd.s32 1, %s36
      %p42 = scmp.ge.s32.totalorder %s41, 2
      %s43 = scalar_select %p42, 0, %s41
      %s44 = sadd.s32 1, %s35
      %s45 = scalar_select %p42, %s44, %s35
      %p46 = scmp.ge.s32.totalorder %s45, 2
      %s47 = scalar_select %p46, 0, %s45
      %s48 = ssub.s32 %s35, %s47
      %p49 = scmp.eq.s32.totalorder %s48, 0
      %s51 = sadd.s32 %s50, 1
      %s52 = scalar_select %p49, %s50, %s51
      %p55 = pneg %p49
      %p56 = scmp.eq.s32.totalorder %s28, 3
      %p57 = por %p55, %p56
      %p58 = scmp.ne.s32.totalorder %s50, %s53
      %p59 = scmp.eq.s32.totalorder %s28, 0
      %p60 = por %p58, %p59
      %p61 = scmp.ne.s32.totalorder %s50, %s53
      %p62 = scmp.eq.s32.totalorder %s33, 3
      %p63 = por %p61, %p62
      %p64 = scmp.ne.s32.totalorder %s53, %s54
      %p65 = scmp.eq.s32.totalorder %s33, 0
      %p66 = por %p64, %p65
      %p67 = scmp.ne.s32.totalorder %s53, %s54
      %p68 = scmp.eq.s32.totalorder %s34, 3
      %p69 = por %p67, %p68
      %p71 = scmp.ne.s32.totalorder %s54, %s70
      %p72 = scmp.eq.s32.totalorder %s34, 0
      %p73 = por %p71, %p72
      %s74 = ssub.s32 %s35, %s47
      %p75 = scmp.eq.s32.totalorder %s74, 0
      %s77 = sadd.s32 %s76, 1
      %s78 = scalar_select %p75, %s76, %s77
      %p81 = pneg %p75
      %p82 = scmp.eq.s32.totalorder %s28, 3
      %p83 = por %p81, %p82
      %p84 = scmp.ne.s32.totalorder %s76, %s79
      %p85 = scmp.eq.s32.totalorder %s28, 0
      %p86 = por %p84, %p85
      %p87 = scmp.ne.s32.totalorder %s76, %s79
      %p88 = scmp.eq.s32.totalorder %s33, 3
      %p89 = por %p87, %p88
      %p90 = scmp.ne.s32.totalorder %s79, %s80
      %p91 = scmp.eq.s32.totalorder %s33, 0
      %p92 = por %p90, %p91
      %p93 = scmp.ne.s32.totalorder %s79, %s80
      %p94 = scmp.eq.s32.totalorder %s34, 3
      %p95 = por %p93, %p94
      %p97 = scmp.ne.s32.totalorder %s80, %s96
      %p98 = scmp.eq.s32.totalorder %s34, 0
      %p99 = por %p97, %p98
      %s101 = sadd.s32 %s100, 1
      %p104 = scmp.eq.s32.totalorder %s28, 3
      %p105 = scmp.ne.s32.totalorder %s100, %s102
      %p106 = scmp.eq.s32.totalorder %s28, 0
      %p107 = por %p105, %p106
      %p108 = scmp.ne.s32.totalorder %s100, %s102
      %p109 = scmp.eq.s32.totalorder %s33, 3
      %p110 = por %p108, %p109
      %p111 = scmp.ne.s32.totalorder %s102, %s103
      %p112 = scmp.eq.s32.totalorder %s33, 0
      %p113 = por %p111, %p112
      %p114 = scmp.ne.s32.totalorder %s102, %s103
      %p115 = scmp.eq.s32.totalorder %s34, 3
      %p116 = por %p114, %p115
      %p118 = scmp.ne.s32.totalorder %s103, %s117
      %p119 = scmp.eq.s32.totalorder %s34, 0
      %p120 = por %p118, %p119
      %s121 = ssub.s32 %s36, %s43
      %p122 = scmp.eq.s32.totalorder %s121, 0
      %s124 = sadd.s32 %s123, 1
      %s125 = scalar_select %p122, %s123, %s124
      %p128 = pneg %p122
      %p129 = scmp.eq.s32.totalorder %s28, 3
      %p130 = por %p128, %p129
      %p131 = scmp.ne.s32.totalorder %s123, %s126
      %p132 = scmp.eq.s32.totalorder %s28, 0
      %p133 = por %p131, %p132
      %p134 = scmp.ne.s32.totalorder %s123, %s126
      %p135 = scmp.eq.s32.totalorder %s33, 3
      %p136 = por %p134, %p135
      %p137 = scmp.ne.s32.totalorder %s126, %s127
      %p138 = scmp.eq.s32.totalorder %s33, 0
      %p139 = por %p137, %p138
      %p140 = scmp.ne.s32.totalorder %s126, %s127
      %p141 = scmp.eq.s32.totalorder %s34, 3
      %p142 = por %p140, %p141
      %p144 = scmp.ne.s32.totalorder %s127, %s143
      %p145 = scmp.eq.s32.totalorder %s34, 0
      %p146 = por %p144, %p145
      %s147 = ssub.s32 %s36, %s43
      %p148 = scmp.eq.s32.totalorder %s147, 0
      %s150 = sadd.s32 %s149, 1
      %s151 = scalar_select %p148, %s149, %s150
      %p154 = pneg %p148
      %p155 = scmp.eq.s32.totalorder %s28, 3
      %p156 = por %p154, %p155
      %p157 = scmp.ne.s32.totalorder %s149, %s152
      %p158 = scmp.eq.s32.totalorder %s28, 0
      %p159 = por %p157, %p158
      %p160 = scmp.ne.s32.totalorder %s149, %s152
      %p161 = scmp.eq.s32.totalorder %s33, 3
      %p162 = por %p160, %p161
      %p163 = scmp.ne.s32.totalorder %s152, %s153
      %p164 = scmp.eq.s32.totalorder %s33, 0
      %p165 = por %p163, %p164
      %p166 = scmp.ne.s32.totalorder %s152, %s153
      %p167 = scmp.eq.s32.totalorder %s34, 3
      %p168 = por %p166, %p167
      %p170 = scmp.ne.s32.totalorder %s153, %s169
      %p171 = scmp.eq.s32.totalorder %s34, 0
      %p172 = por %p170, %p171
      %s173 = ssub.s32 %s36, %s43
      %p174 = scmp.eq.s32.totalorder %s173, 0
      %s176 = sadd.s32 %s175, 1
      %s177 = scalar_select %p174, %s175, %s176
      %p180 = pneg %p174
      %p181 = scmp.eq.s32.totalorder %s28, 3
      %p182 = por %p180, %p181
      %p183 = scmp.ne.s32.totalorder %s175, %s178
      %p184 = scmp.eq.s32.totalorder %s28, 0
      %p185 = por %p183, %p184
      %p186 = scmp.ne.s32.totalorder %s175, %s178
      %p187 = scmp.eq.s32.totalorder %s33, 3
      %p188 = por %p186, %p187
      %p189 = scmp.ne.s32.totalorder %s178, %s179
      %p190 = scmp.eq.s32.totalorder %s33, 0
      %p191 = por %p189, %p190
      %p192 = scmp.ne.s32.totalorder %s178, %s179
      %p193 = scmp.eq.s32.totalorder %s34, 3
      %p194 = por %p192, %p193
      %p196 = scmp.ne.s32.totalorder %s179, %s195
      %p197 = scmp.eq.s32.totalorder %s34, 0
      %p198 = por %p196, %p197
      %s199 = ssub.s32 %s36, %s43
      %p200 = scmp.eq.s32.totalorder %s199, 0
      %s202 = sadd.s32 %s201, 1
      %s203 = scalar_select %p200, %s201, %s202
      %p206 = pneg %p200
      %p207 = scmp.eq.s32.totalorder %s28, 3
      %p208 = por %p206, %p207
      %p209 = scmp.ne.s32.totalorder %s201, %s204
      %p210 = scmp.eq.s32.totalorder %s28, 0
      %p211 = por %p209, %p210
      %p212 = scmp.ne.s32.totalorder %s201, %s204
      %p213 = scmp.eq.s32.totalorder %s33, 3
      %p214 = por %p212, %p213
      %p215 = scmp.ne.s32.totalorder %s204, %s205
      %p216 = scmp.eq.s32.totalorder %s33, 0
      %p217 = por %p215, %p216
      %p218 = scmp.ne.s32.totalorder %s204, %s205
      %p219 = scmp.eq.s32.totalorder %s34, 3
      %p220 = por %p218, %p219
      %p222 = scmp.ne.s32.totalorder %s205, %s221
      %p223 = scmp.eq.s32.totalorder %s34, 0
      %p224 = por %p222, %p223
      %s225 = ssub.s32 %s36, %s43
      %p226 = scmp.eq.s32.totalorder %s225, 0
      %s228 = sadd.s32 %s227, 1
      %s229 = scalar_select %p226, %s227, %s228
      %p232 = pneg %p226
      %p233 = scmp.eq.s32.totalorder %s28, 3
      %p234 = por %p232, %p233
      %p235 = scmp.ne.s32.totalorder %s227, %s230
      %p236 = scmp.eq.s32.totalorder %s28, 0
      %p237 = por %p235, %p236
      %p238 = scmp.ne.s32.totalorder %s227, %s230
      %p239 = scmp.eq.s32.totalorder %s33, 3
      %p240 = por %p238, %p239
      %p241 = scmp.ne.s32.totalorder %s230, %s231
      %p242 = scmp.eq.s32.totalorder %s33, 0
      %p243 = por %p241, %p242
      %p244 = scmp.ne.s32.totalorder %s230, %s231
      %p245 = scmp.eq.s32.totalorder %s34, 3
      %p246 = por %p244, %p245
      %p248 = scmp.ne.s32.totalorder %s231, %s247
      %p249 = scmp.eq.s32.totalorder %s34, 0
      %p250 = por %p248, %p249
      %s251 = ssub.s32 %s36, %s43
      %p252 = scmp.eq.s32.totalorder %s251, 0
      %s254 = sadd.s32 %s253, 1
      %s255 = scalar_select %p252, %s253, %s254
      %p258 = pneg %p252
      %p259 = scmp.eq.s32.totalorder %s28, 3
      %p260 = por %p258, %p259
      %p261 = scmp.ne.s32.totalorder %s253, %s256
      %p262 = scmp.eq.s32.totalorder %s28, 0
      %p263 = por %p261, %p262
      %p264 = scmp.ne.s32.totalorder %s253, %s256
      %p265 = scmp.eq.s32.totalorder %s33, 3
      %p266 = por %p264, %p265
      %p267 = scmp.ne.s32.totalorder %s256, %s257
      %p268 = scmp.eq.s32.totalorder %s33, 0
      %p269 = por %p267, %p268
      %p270 = scmp.ne.s32.totalorder %s256, %s257
      %p271 = scmp.eq.s32.totalorder %s34, 3
      %p272 = por %p270, %p271
      %p274 = scmp.ne.s32.totalorder %s257, %s273
      %p275 = scmp.eq.s32.totalorder %s34, 0
      %p276 = por %p274, %p275
      %s277 = ssub.s32 %s36, %s43
      %p278 = scmp.eq.s32.totalorder %s277, 0
      %s280 = sadd.s32 %s279, 1
      %s281 = scalar_select %p278, %s279, %s280
      %p284 = pneg %p278
      %p285 = scmp.eq.s32.totalorder %s28, 3
      %p286 = por %p284, %p285
      %p287 = scmp.ne.s32.totalorder %s279, %s282
      %p288 = scmp.eq.s32.totalorder %s28, 0
      %p289 = por %p287, %p288
      %p290 = scmp.ne.s32.totalorder %s279, %s282
      %p291 = scmp.eq.s32.totalorder %s33, 3
      %p292 = por %p290, %p291
      %p293 = scmp.ne.s32.totalorder %s282, %s283
      %p294 = scmp.eq.s32.totalorder %s33, 0
      %p295 = por %p293, %p294
      %p296 = scmp.ne.s32.totalorder %s282, %s283
      %p297 = scmp.eq.s32.totalorder %s34, 3
      %p298 = por %p296, %p297
      %p300 = scmp.ne.s32.totalorder %s283, %s299
      %p301 = scmp.eq.s32.totalorder %s34, 0
      %p302 = por %p300, %p301
      %s303 = ssub.s32 %s36, %s43
      %p304 = scmp.eq.s32.totalorder %s303, 0
      %s306 = sadd.s32 %s305, 1
      %s307 = scalar_select %p304, %s305, %s306
      %p310 = pneg %p304
      %p311 = scmp.eq.s32.totalorder %s28, 3
      %p312 = por %p310, %p311
      %p313 = scmp.ne.s32.totalorder %s305, %s308
      %p314 = scmp.eq.s32.totalorder %s28, 0
      %p315 = por %p313, %p314
      %p316 = scmp.ne.s32.totalorder %s305, %s308
      %p317 = scmp.eq.s32.totalorder %s33, 3
      %p318 = por %p316, %p317
      %p319 = scmp.ne.s32.totalorder %s308, %s309
      %p320 = scmp.eq.s32.totalorder %s33, 0
      %p321 = por %p319, %p320
      %p322 = scmp.ne.s32.totalorder %s308, %s309
      %p323 = scmp.eq.s32.totalorder %s34, 3
      %p324 = por %p322, %p323
      %p326 = scmp.ne.s32.totalorder %s309, %s325
      %p327 = scmp.eq.s32.totalorder %s34, 0
      %p328 = por %p326, %p327
      %s329 = ssub.s32 %s36, %s43
      %p330 = scmp.eq.s32.totalorder %s329, 0
      %s332 = sadd.s32 %s331, 1
      %s333 = scalar_select %p330, %s331, %s332
      %p336 = pneg %p330
      %p337 = scmp.eq.s32.totalorder %s28, 3
      %p338 = por %p336, %p337
      %p339 = scmp.ne.s32.totalorder %s331, %s334
      %p340 = scmp.eq.s32.totalorder %s28, 0
      %p341 = por %p339, %p340
      %p342 = scmp.ne.s32.totalorder %s331, %s334
      %p343 = scmp.eq.s32.totalorder %s33, 3
      %p344 = por %p342, %p343
      %p345 = scmp.ne.s32.totalorder %s334, %s335
      %p346 = scmp.eq.s32.totalorder %s33, 0
      %p347 = por %p345, %p346
      %p348 = scmp.ne.s32.totalorder %s334, %s335
      %p349 = scmp.eq.s32.totalorder %s34, 3
      %p350 = por %p348, %p349
      %p352 = scmp.ne.s32.totalorder %s335, %s351
      %p353 = scmp.eq.s32.totalorder %s34, 0
      %p354 = por %p352, %p353
      %s355 = ssub.s32 %s36, %s43
      %p356 = scmp.eq.s32.totalorder %s355, 0
      %s358 = sadd.s32 %s357, 1
      %s359 = scalar_select %p356, %s357, %s358
      %p362 = pneg %p356
      %p363 = scmp.eq.s32.totalorder %s28, 3
      %p364 = por %p362, %p363
      %p365 = scmp.ne.s32.totalorder %s357, %s360
      %p366 = scmp.eq.s32.totalorder %s28, 0
      %p367 = por %p365, %p366
      %p368 = scmp.ne.s32.totalorder %s357, %s360
      %p369 = scmp.eq.s32.totalorder %s33, 3
      %p370 = por %p368, %p369
      %p371 = scmp.ne.s32.totalorder %s360, %s361
      %p372 = scmp.eq.s32.totalorder %s33, 0
      %p373 = por %p371, %p372
      %p374 = scmp.ne.s32.totalorder %s360, %s361
      %p375 = scmp.eq.s32.totalorder %s34, 3
      %p376 = por %p374, %p375
      %p378 = scmp.ne.s32.totalorder %s361, %s377
      %p379 = scmp.eq.s32.totalorder %s34, 0
      %p380 = por %p378, %p379
      %s381 = ssub.s32 %s36, %s43
      %p382 = scmp.eq.s32.totalorder %s381, 0
      %s384 = sadd.s32 %s383, 1
      %s385 = scalar_select %p382, %s383, %s384
      %p388 = pneg %p382
      %p389 = scmp.eq.s32.totalorder %s28, 3
      %p390 = por %p388, %p389
      %p391 = scmp.ne.s32.totalorder %s383, %s386
      %p392 = scmp.eq.s32.totalorder %s28, 0
      %p393 = por %p391, %p392
      %p394 = scmp.ne.s32.totalorder %s383, %s386
      %p395 = scmp.eq.s32.totalorder %s33, 3
      %p396 = por %p394, %p395
      %p397 = scmp.ne.s32.totalorder %s386, %s387
      %p398 = scmp.eq.s32.totalorder %s33, 0
      %p399 = por %p397, %p398
      %p400 = scmp.ne.s32.totalorder %s386, %s387
      %p401 = scmp.eq.s32.totalorder %s34, 3
      %p402 = por %p400, %p401
      %p404 = scmp.ne.s32.totalorder %s387, %s403
      %p405 = scmp.eq.s32.totalorder %s34, 0
      %p406 = por %p404, %p405
      %s407 = ssub.s32 %s36, %s43
      %p408 = scmp.eq.s32.totalorder %s407, 0
      %s410 = sadd.s32 %s409, 1
      %s411 = scalar_select %p408, %s409, %s410
      %p414 = pneg %p408
      %p415 = scmp.eq.s32.totalorder %s28, 3
      %p416 = por %p414, %p415
      %p417 = scmp.ne.s32.totalorder %s409, %s412
      %p418 = scmp.eq.s32.totalorder %s28, 0
      %p419 = por %p417, %p418
      %p420 = scmp.ne.s32.totalorder %s409, %s412
      %p421 = scmp.eq.s32.totalorder %s33, 3
      %p422 = por %p420, %p421
      %p423 = scmp.ne.s32.totalorder %s412, %s413
      %p424 = scmp.eq.s32.totalorder %s33, 0
      %p425 = por %p423, %p424
      %p426 = scmp.ne.s32.totalorder %s412, %s413
      %p427 = scmp.eq.s32.totalorder %s34, 3
      %p428 = por %p426, %p427
      %p430 = scmp.ne.s32.totalorder %s413, %s429
      %p431 = scmp.eq.s32.totalorder %s34, 0
      %p432 = por %p430, %p431
      %s433 = ssub.s32 %s36, %s43
      %p434 = scmp.eq.s32.totalorder %s433, 0
      %s436 = sadd.s32 %s435, 1
      %s437 = scalar_select %p434, %s435, %s436
      %p440 = pneg %p434
      %p441 = scmp.eq.s32.totalorder %s28, 3
      %p442 = por %p440, %p441
      %p443 = scmp.ne.s32.totalorder %s435, %s438
      %p444 = scmp.eq.s32.totalorder %s28, 0
      %p445 = por %p443, %p444
      %p446 = scmp.ne.s32.totalorder %s435, %s438
      %p447 = scmp.eq.s32.totalorder %s33, 3
      %p448 = por %p446, %p447
      %p449 = scmp.ne.s32.totalorder %s438, %s439
      %p450 = scmp.eq.s32.totalorder %s33, 0
      %p451 = por %p449, %p450
      %p452 = scmp.ne.s32.totalorder %s438, %s439
      %p453 = scmp.eq.s32.totalorder %s34, 3
      %p454 = por %p452, %p453
      %p456 = scmp.ne.s32.totalorder %s439, %s455
      %p457 = scmp.eq.s32.totalorder %s34, 0
      %p458 = por %p456, %p457
      %s459 = ssub.s32 %s36, %s43
      %p460 = scmp.eq.s32.totalorder %s459, 0
      %s462 = sadd.s32 %s461, 1
      %s463 = scalar_select %p460, %s461, %s462
      %p466 = pneg %p460
      %p467 = scmp.eq.s32.totalorder %s28, 3
      %p468 = por %p466, %p467
      %p469 = scmp.ne.s32.totalorder %s461, %s464
      %p470 = scmp.eq.s32.totalorder %s28, 0
      %p471 = por %p469, %p470
      %p472 = scmp.ne.s32.totalorder %s461, %s464
      %p473 = scmp.eq.s32.totalorder %s33, 3
      %p474 = por %p472, %p473
      %p475 = scmp.ne.s32.totalorder %s464, %s465
      %p476 = scmp.eq.s32.totalorder %s33, 0
      %p477 = por %p475, %p476
      %p478 = scmp.ne.s32.totalorder %s464, %s465
      %p479 = scmp.eq.s32.totalorder %s34, 3
      %p480 = por %p478, %p479
      %p482 = scmp.ne.s32.totalorder %s465, %s481
      %p483 = scmp.eq.s32.totalorder %s34, 0
      %p484 = por %p482, %p483
      %s485 = ssub.s32 %s36, %s43
      %p486 = scmp.eq.s32.totalorder %s485, 0
      %s488 = sadd.s32 %s487, 1
      %s489 = scalar_select %p486, %s487, %s488
      %p492 = pneg %p486
      %p493 = scmp.eq.s32.totalorder %s28, 3
      %p494 = por %p492, %p493
      %p495 = scmp.ne.s32.totalorder %s487, %s490
      %p496 = scmp.eq.s32.totalorder %s28, 0
      %p497 = por %p495, %p496
      %p498 = scmp.ne.s32.totalorder %s487, %s490
      %p499 = scmp.eq.s32.totalorder %s33, 3
      %p500 = por %p498, %p499
      %p501 = scmp.ne.s32.totalorder %s490, %s491
      %p502 = scmp.eq.s32.totalorder %s33, 0
      %p503 = por %p501, %p502
      %p504 = scmp.ne.s32.totalorder %s490, %s491
      %p505 = scmp.eq.s32.totalorder %s34, 3
      %p506 = por %p504, %p505
      %p508 = scmp.ne.s32.totalorder %s491, %s507
      %p509 = scmp.eq.s32.totalorder %s34, 0
      %p510 = por %p508, %p509
      %s511 = ssub.s32 %s36, %s43
      %p512 = scmp.eq.s32.totalorder %s511, 0
      %s514 = sadd.s32 %s513, 1
      %s515 = scalar_select %p512, %s513, %s514
      %p518 = pneg %p512
      %p519 = scmp.eq.s32.totalorder %s28, 3
      %p520 = por %p518, %p519
      %p521 = scmp.ne.s32.totalorder %s513, %s516
      %p522 = scmp.eq.s32.totalorder %s28, 0
      %p523 = por %p521, %p522
      %p524 = scmp.ne.s32.totalorder %s513, %s516
      %p525 = scmp.eq.s32.totalorder %s33, 3
      %p526 = por %p524, %p525
      %p527 = scmp.ne.s32.totalorder %s516, %s517
      %p528 = scmp.eq.s32.totalorder %s33, 0
      %p529 = por %p527, %p528
      %p530 = scmp.ne.s32.totalorder %s516, %s517
      %p531 = scmp.eq.s32.totalorder %s34, 3
      %p532 = por %p530, %p531
      %p534 = scmp.ne.s32.totalorder %s517, %s533
      %p535 = scmp.eq.s32.totalorder %s34, 0
      %p536 = por %p534, %p535
      %s537 = ssub.s32 %s36, %s43
      %s538 = ssub.s32 %s35, %s47
      %s539 = sor.u32 %s537, %s538
      %p540 = scmp.eq.s32.totalorder %s539, 0
      %s542 = sadd.s32 %s541, 1
      %s543 = scalar_select %p540, %s541, %s542
      %p546 = pneg %p540
      %p547 = scmp.eq.s32.totalorder %s28, 3
      %p548 = por %p546, %p547
      %p549 = scmp.ne.s32.totalorder %s541, %s544
      %p550 = scmp.eq.s32.totalorder %s28, 0
      %p551 = por %p549, %p550
      %p552 = scmp.ne.s32.totalorder %s541, %s544
      %p553 = scmp.eq.s32.totalorder %s33, 3
      %p554 = por %p552, %p553
      %p555 = scmp.ne.s32.totalorder %s544, %s545
      %p556 = scmp.eq.s32.totalorder %s33, 0
      %p557 = por %p555, %p556
      %p558 = scmp.ne.s32.totalorder %s544, %s545
      %p559 = scmp.eq.s32.totalorder %s34, 3
      %p560 = por %p558, %p559
      %p562 = scmp.ne.s32.totalorder %s545, %s561
      %p563 = scmp.eq.s32.totalorder %s34, 0
      %p564 = por %p562, %p563
      %p565 = scmp.le.s32.totalorder 1, %s28
      %p566 = scmp.lt.s32.totalorder %s28, 5
      %p567 = pnand %p565, %p566
      %p568 = pneg %p567
      // Predicated region
      $region9: #{tpu_custom_call.1} parent=5 // pred_check
        _
      $region10: #{tpu_custom_call.1} parent=5 // pred_check_branch
        %570 = sbr.rel (%p567) target = $region12
      $region11: #{tpu_custom_call.1} parent=5 // pred_region
        %s571 = ssub.s32 %s28, 1
        // Predicated region
        $region13: #{tpu_custom_call.1} parent=11 // pred_check
          %p572 = pneg %p113
        $region14: #{tpu_custom_call.1} parent=11 // pred_check_branch
          %574 = sbr.rel (%p572) target = $region16
        $region15: #{tpu_custom_call.1} parent=11 // pred_region
          _
        $region16: #{tpu_custom_call.1} parent=11 // pred_fallthru
          _
      $region12: #{tpu_custom_call.1} parent=5 // pred_fallthru
        _
      %p575 = scmp.lt.s32.totalorder %s28, 4
      // Predicated region
      $region17: #{tpu_custom_call.1} parent=5 // pred_check
        %p576 = pneg %p575
      $region18: #{tpu_custom_call.1} parent=5 // pred_check_branch
        %578 = sbr.rel (%p576) target = $region20
      $region19: #{tpu_custom_call.1} parent=5 // pred_region
        // Predicated region
        $region21: #{tpu_custom_call.1} parent=19 // pred_check
          %p579 = pneg %p60
        $region22: #{tpu_custom_call.1} parent=19 // pred_check_branch
          %581 = sbr.rel (%p579) target = $region24
        $region23: #{tpu_custom_call.1} parent=19 // pred_region
          %p582 = scmp.lt.s32.totalorder %s35, 1
          %s583 = scalar_select %p582, %s35, 1
          %s584 = smul.addr %s583, 8
          %s585 = scalar_lea.vmem %s0, %s584
        $region24: #{tpu_custom_call.1} parent=19 // pred_fallthru
          _
        // Predicated region
        $region25: #{tpu_custom_call.1} parent=19 // pred_check
          %p586 = pneg %p86
        $region26: #{tpu_custom_call.1} parent=19 // pred_check_branch
          %588 = sbr.rel (%p586) target = $region28
        $region27: #{tpu_custom_call.1} parent=19 // pred_region
          %p589 = scmp.lt.s32.totalorder %s35, 1
          %s590 = scalar_select %p589, %s35, 1
          %s591 = scalar_lea.vmem %s1, %s590
        $region28: #{tpu_custom_call.1} parent=19 // pred_fallthru
          _
        // Predicated region
        $region29: #{tpu_custom_call.1} parent=19 // pred_check
          %p592 = pneg %p133
        $region30: #{tpu_custom_call.1} parent=19 // pred_check_branch
          %594 = sbr.rel (%p592) target = $region32
        $region31: #{tpu_custom_call.1} parent=19 // pred_region
          %p595 = scmp.lt.s32.totalorder %s36, 1
          %s596 = scalar_select %p595, %s36, 1
          %s597 = smul.addr %s596, 16
          %s598 = smul.addr %s597, 4
          %s599 = scalar_lea.vmem %s3, %s598
        $region32: #{tpu_custom_call.1} parent=19 // pred_fallthru
          _
        // Predicated region
        $region33: #{tpu_custom_call.1} parent=19 // pred_check
          %p600 = pneg %p159
        $region34: #{tpu_custom_call.1} parent=19 // pred_check_branch
          %602 = sbr.rel (%p600) target = $region36
        $region35: #{tpu_custom_call.1} parent=19 // pred_region
          %p603 = scmp.lt.s32.totalorder %s36, 1
          %s604 = scalar_select %p603, %s36, 1
          %s605 = smul.addr %s604, 16
          %s606 = smul.addr %s605, 4
          %s607 = scalar_lea.vmem %s4, %s606
        $region36: #{tpu_custom_call.1} parent=19 // pred_fallthru
          _
        // Predicated region
        $region37: #{tpu_custom_call.1} parent=19 // pred_check
          %p608 = pneg %p185
        $region38: #{tpu_custom_call.1} parent=19 // pred_check_branch
          %610 = sbr.rel (%p608) target = $region40
        $region39: #{tpu_custom_call.1} parent=19 // pred_region
          %p611 = scmp.lt.s32.totalorder %s36, 1
          %s612 = scalar_select %p611, %s36, 1
          %s613 = smul.addr %s612, 16
          %s614 = smul.addr %s613, 4
          %s615 = scalar_lea.vmem %s5, %s614
        $region40: #{tpu_custom_call.1} parent=19 // pred_fallthru
          _
        // Predicated region
        $region41: #{tpu_custom_call.1} parent=19 // pred_check
          %p616 = pneg %p211
        $region42: #{tpu_custom_call.1} parent=19 // pred_check_branch
          %618 = sbr.rel (%p616) target = $region44
        $region43: #{tpu_custom_call.1} parent=19 // pred_region
          %p619 = scmp.lt.s32.totalorder %s36, 1
          %s620 = scalar_select %p619, %s36, 1
          %s621 = smul.addr %s620, 4
          %s622 = scalar_lea.vmem %s6, %s621
        $region44: #{tpu_custom_call.1} parent=19 // pred_fallthru
          _
        // Predicated region
        $region45: #{tpu_custom_call.1} parent=19 // pred_check
          %p623 = pneg %p237
        $region46: #{tpu_custom_call.1} parent=19 // pred_check_branch
          %625 = sbr.rel (%p623) target = $region48
        $region47: #{tpu_custom_call.1} parent=19 // pred_region
          %p626 = scmp.lt.s32.totalorder %s36, 1
          %s627 = scalar_select %p626, %s36, 1
          %s628 = smul.addr %s627, 4
          %s629 = scalar_lea.vmem %s7, %s628
        $region48: #{tpu_custom_call.1} parent=19 // pred_fallthru
          _
        // Predicated region
        $region49: #{tpu_custom_call.1} parent=19 // pred_check
          %p630 = pneg %p263
        $region50: #{tpu_custom_call.1} parent=19 // pred_check_branch
          %632 = sbr.rel (%p630) target = $region52
        $region51: #{tpu_custom_call.1} parent=19 // pred_region
          %p633 = scmp.lt.s32.totalorder %s36, 1
          %s634 = scalar_select %p633, %s36, 1
          %s635 = smul.addr %s634, 4
          %s636 = scalar_lea.vmem %s8, %s635
        $region52: #{tpu_custom_call.1} parent=19 // pred_fallthru
          _
        // Predicated region
        $region53: #{tpu_custom_call.1} parent=19 // pred_check
          %p637 = pneg %p289
        $region54: #{tpu_custom_call.1} parent=19 // pred_check_branch
          %639 = sbr.rel (%p637) target = $region56
        $region55: #{tpu_custom_call.1} parent=19 // pred_region
          %p640 = scmp.lt.s32.totalorder %s36, 1
          %s641 = scalar_select %p640, %s36, 1
          %s642 = smul.addr %s641, 4
          %s643 = smul.addr %s642, 4
          %s644 = scalar_lea.vmem %s9, %s643
        $region56: #{tpu_custom_call.1} parent=19 // pred_fallthru
          _
        // Predicated region
        $region57: #{tpu_custom_call.1} parent=19 // pred_check
          %p645 = pneg %p315
        $region58: #{tpu_custom_call.1} parent=19 // pred_check_branch
          %647 = sbr.rel (%p645) target = $region60
        $region59: #{tpu_custom_call.1} parent=19 // pred_region
          %p648 = scmp.lt.s32.totalorder %s36, 1
          %s649 = scalar_select %p648, %s36, 1
          %s650 = scalar_lea.vmem %s10, %s649
        $region60: #{tpu_custom_call.1} parent=19 // pred_fallthru
          _
        // Predicated region
        $region61: #{tpu_custom_call.1} parent=19 // pred_check
          %p651 = pneg %p341
        $region62: #{tpu_custom_call.1} parent=19 // pred_check_branch
          %653 = sbr.rel (%p651) target = $region64
        $region63: #{tpu_custom_call.1} parent=19 // pred_region
          %p654 = scmp.lt.s32.totalorder %s36, 1
          %s655 = scalar_select %p654, %s36, 1
          %s656 = scalar_lea.vmem %s11, %s655
        $region64: #{tpu_custom_call.1} parent=19 // pred_fallthru
          _
        // Predicated region
        $region65: #{tpu_custom_call.1} parent=19 // pred_check
          %p657 = pneg %p367
        $region66: #{tpu_custom_call.1} parent=19 // pred_check_branch
          %659 = sbr.rel (%p657) target = $region68
        $region67: #{tpu_custom_call.1} parent=19 // pred_region
          %p660 = scmp.lt.s32.totalorder %s36, 1
          %s661 = scalar_select %p660, %s36, 1
          %s662 = scalar_lea.vmem %s12, %s661
        $region68: #{tpu_custom_call.1} parent=19 // pred_fallthru
          _
        // Predicated region
        $region69: #{tpu_custom_call.1} parent=19 // pred_check
          %p663 = pneg %p393
        $region70: #{tpu_custom_call.1} parent=19 // pred_check_branch
          %665 = sbr.rel (%p663) target = $region72
        $region71: #{tpu_custom_call.1} parent=19 // pred_region
          %p666 = scmp.lt.s32.totalorder %s36, 1
          %s667 = scalar_select %p666, %s36, 1
          %s668 = smul.addr %s667, 4
          %s669 = smul.addr %s668, 4
          %s670 = scalar_lea.vmem %s13, %s669
        $region72: #{tpu_custom_call.1} parent=19 // pred_fallthru
          _
        // Predicated region
        $region73: #{tpu_custom_call.1} parent=19 // pred_check
          %p671 = pneg %p419
        $region74: #{tpu_custom_call.1} parent=19 // pred_check_branch
          %673 = sbr.rel (%p671) target = $region76
        $region75: #{tpu_custom_call.1} parent=19 // pred_region
          %p674 = scmp.lt.s32.totalorder %s36, 1
          %s675 = scalar_select %p674, %s36, 1
          %s676 = scalar_lea.vmem %s14, %s675
        $region76: #{tpu_custom_call.1} parent=19 // pred_fallthru
          _
        // Predicated region
        $region77: #{tpu_custom_call.1} parent=19 // pred_check
          %p677 = pneg %p445
        $region78: #{tpu_custom_call.1} parent=19 // pred_check_branch
          %679 = sbr.rel (%p677) target = $region80
        $region79: #{tpu_custom_call.1} parent=19 // pred_region
          %p680 = scmp.lt.s32.totalorder %s36, 1
          %s681 = scalar_select %p680, %s36, 1
          %s682 = smul.addr %s681, 8
          %s683 = smul.addr %s682, 4
          %s684 = scalar_lea.vmem %s15, %s683
        $region80: #{tpu_custom_call.1} parent=19 // pred_fallthru
          _
        // Predicated region
        $region81: #{tpu_custom_call.1} parent=19 // pred_check
          %p685 = pneg %p471
        $region82: #{tpu_custom_call.1} parent=19 // pred_check_branch
          %687 = sbr.rel (%p685) target = $region84
        $region83: #{tpu_custom_call.1} parent=19 // pred_region
          %p688 = scmp.lt.s32.totalorder %s36, 1
          %s689 = scalar_select %p688, %s36, 1
          %s690 = scalar_lea.vmem %s16, %s689
        $region84: #{tpu_custom_call.1} parent=19 // pred_fallthru
          _
        // Predicated region
        $region85: #{tpu_custom_call.1} parent=19 // pred_check
          %p691 = pneg %p497
        $region86: #{tpu_custom_call.1} parent=19 // pred_check_branch
          %693 = sbr.rel (%p691) target = $region88
        $region87: #{tpu_custom_call.1} parent=19 // pred_region
          %p694 = scmp.lt.s32.totalorder %s36, 1
          %s695 = scalar_select %p694, %s36, 1
          %s696 = scalar_lea.vmem %s17, %s695
        $region88: #{tpu_custom_call.1} parent=19 // pred_fallthru
          _
        // Predicated region
        $region89: #{tpu_custom_call.1} parent=19 // pred_check
          %p697 = pneg %p523
        $region90: #{tpu_custom_call.1} parent=19 // pred_check_branch
          %699 = sbr.rel (%p697) target = $region92
        $region91: #{tpu_custom_call.1} parent=19 // pred_region
          %p700 = scmp.lt.s32.totalorder %s36, 1
          %s701 = scalar_select %p700, %s36, 1
          %s702 = scalar_lea.vmem %s18, %s701
        $region92: #{tpu_custom_call.1} parent=19 // pred_fallthru
          _
      $region20: #{tpu_custom_call.1} parent=5 // pred_fallthru
        _
      %p703 = scmp.le.s32.totalorder 1, %s28
      %p704 = scmp.lt.s32.totalorder %s28, 5
      %p705 = pnand %p703, %p704
      %p706 = pneg %p705
      // Predicated region
      $region93: #{tpu_custom_call.1} parent=5 // pred_check
        _
      $region94: #{tpu_custom_call.1} parent=5 // pred_check_branch
        %708 = sbr.rel (%p705) target = $region96
      $region95: #{tpu_custom_call.1} parent=5 // pred_region
        %s709 = ssub.s32 %s28, 1
        %p710 = scmp.lt.s32.totalorder %s37, 1
        %s711 = scalar_select %p710, %s37, 1
        %s712 = smul.addr %s711, 8
        %s713 = scalar_lea.vmem %s0, %s712
        %p714 = pneg %p66
        %p715 = pneg %p63
        %p716 = scmp.lt.s32.totalorder %s37, 1
        %s717 = scalar_select %p716, %s37, 1
        %s718 = scalar_lea.vmem %s1, %s717
        %p719 = pneg %p92
        %p720 = pneg %p89
        %p721 = pneg %p113
        %p722 = pneg %p110
        %p723 = scmp.lt.s32.totalorder %s38, 1
        %s724 = scalar_select %p723, %s38, 1
        %s725 = smul.addr %s724, 16
        %s726 = smul.addr %s725, 4
        %s727 = scalar_lea.vmem %s3, %s726
        %p728 = pneg %p139
        %p729 = pneg %p136
        %p730 = scmp.lt.s32.totalorder %s38, 1
        %s731 = scalar_select %p730, %s38, 1
        %s732 = smul.addr %s731, 16
        %s733 = smul.addr %s732, 4
        %s734 = scalar_lea.vmem %s4, %s733
        %p735 = pneg %p165
        %p736 = pneg %p162
        %p737 = scmp.lt.s32.totalorder %s38, 1
        %s738 = scalar_select %p737, %s38, 1
        %s739 = smul.addr %s738, 16
        %s740 = smul.addr %s739, 4
        %s741 = scalar_lea.vmem %s5, %s740
        %p742 = pneg %p191
        %p743 = pneg %p188
        %p744 = scmp.lt.s32.totalorder %s38, 1
        %s745 = scalar_select %p744, %s38, 1
        %s746 = smul.addr %s745, 4
        %s747 = scalar_lea.vmem %s6, %s746
        %p748 = pneg %p217
        %p749 = pneg %p214
        %p750 = scmp.lt.s32.totalorder %s38, 1
        %s751 = scalar_select %p750, %s38, 1
        %s752 = smul.addr %s751, 4
        %s753 = scalar_lea.vmem %s7, %s752
        %p754 = pneg %p243
        %p755 = pneg %p240
        %p756 = scmp.lt.s32.totalorder %s38, 1
        %s757 = scalar_select %p756, %s38, 1
        %s758 = smul.addr %s757, 4
        %s759 = scalar_lea.vmem %s8, %s758
        %p760 = pneg %p269
        %p761 = pneg %p266
        %p762 = scmp.lt.s32.totalorder %s38, 1
        %s763 = scalar_select %p762, %s38, 1
        %s764 = smul.addr %s763, 4
        %s765 = smul.addr %s764, 4
        %s766 = scalar_lea.vmem %s9, %s765
        %p767 = pneg %p295
        %p768 = pneg %p292
        %p769 = scmp.lt.s32.totalorder %s38, 1
        %s770 = scalar_select %p769, %s38, 1
        %s771 = scalar_lea.vmem %s10, %s770
        %p772 = pneg %p321
        %p773 = pneg %p318
        %p774 = scmp.lt.s32.totalorder %s38, 1
        %s775 = scalar_select %p774, %s38, 1
        %s776 = scalar_lea.vmem %s11, %s775
        %p777 = pneg %p347
        %p778 = pneg %p344
        %p779 = scmp.lt.s32.totalorder %s38, 1
        %s780 = scalar_select %p779, %s38, 1
        %s781 = scalar_lea.vmem %s12, %s780
        %p782 = pneg %p373
        %p783 = pneg %p370
        %p784 = scmp.lt.s32.totalorder %s38, 1
        %s785 = scalar_select %p784, %s38, 1
        %s786 = smul.addr %s785, 4
        %s787 = smul.addr %s786, 4
        %s788 = scalar_lea.vmem %s13, %s787
        %p789 = pneg %p399
        %p790 = pneg %p396
        %p791 = scmp.lt.s32.totalorder %s38, 1
        %s792 = scalar_select %p791, %s38, 1
        %s793 = scalar_lea.vmem %s14, %s792
        %p794 = pneg %p425
        %p795 = pneg %p422
        %p796 = scmp.lt.s32.totalorder %s38, 1
        %s797 = scalar_select %p796, %s38, 1
        %s798 = smul.addr %s797, 8
        %s799 = smul.addr %s798, 4
        %s800 = scalar_lea.vmem %s15, %s799
        %p801 = pneg %p451
        %p802 = pneg %p448
        %p803 = scmp.lt.s32.totalorder %s38, 1
        %s804 = scalar_select %p803, %s38, 1
        %s805 = scalar_lea.vmem %s16, %s804
        %p806 = pneg %p477
        %p807 = pneg %p474
        %p808 = scmp.lt.s32.totalorder %s38, 1
        %s809 = scalar_select %p808, %s38, 1
        %s810 = scalar_lea.vmem %s17, %s809
        %p811 = pneg %p503
        %p812 = pneg %p500
        %p813 = scmp.lt.s32.totalorder %s38, 1
        %s814 = scalar_select %p813, %s38, 1
        %s815 = scalar_lea.vmem %s18, %s814
        %p816 = pneg %p529
        %p817 = pneg %p526
        %p818 = pneg %p557
        %p819 = pneg %p554
        %s820 = sand.u32 %s544, 1
        %s821 = scalar_lea.sflag [#allocation4], %s820
        %s822 = sand.u32 %s544, 1
        %s823 = smul.addr %s822, 8
        %s824 = scalar_lea.vmem [#allocation3], %s823
        %p825 = scmp.lt.s32.totalorder %s37, 1
        %s826 = scalar_select %p825, %s37, 1
        %s827 = smul.addr %s826, 8
        %s828 = scalar_lea.vmem %s0, %s827
        %p829 = scmp.lt.s32.totalorder %s37, 1
        %s830 = scalar_select %p829, %s37, 1
        %s831 = scalar_lea.vmem %s1, %s830
        %p832 = scmp.lt.s32.totalorder %s38, 1
        %s833 = scalar_select %p832, %s38, 1
        %s834 = smul.addr %s833, 16
        %s835 = smul.addr %s834, 4
        %s836 = scalar_lea.vmem %s3, %s835
        %p837 = scmp.lt.s32.totalorder %s38, 1
        %s838 = scalar_select %p837, %s38, 1
        %s839 = smul.addr %s838, 16
        %s840 = smul.addr %s839, 4
        %s841 = scalar_lea.vmem %s4, %s840
        %p842 = scmp.lt.s32.totalorder %s38, 1
        %s843 = scalar_select %p842, %s38, 1
        %s844 = smul.addr %s843, 16
        %s845 = smul.addr %s844, 4
        %s846 = scalar_lea.vmem %s5, %s845
        %p847 = scmp.lt.s32.totalorder %s38, 1
        %s848 = scalar_select %p847, %s38, 1
        %s849 = smul.addr %s848, 4
        %s850 = scalar_lea.vmem %s6, %s849
        %p851 = scmp.lt.s32.totalorder %s38, 1
        %s852 = scalar_select %p851, %s38, 1
        %s853 = smul.addr %s852, 4
        %s854 = scalar_lea.vmem %s7, %s853
        %p855 = scmp.lt.s32.totalorder %s38, 1
        %s856 = scalar_select %p855, %s38, 1
        %s857 = smul.addr %s856, 4
        %s858 = scalar_lea.vmem %s8, %s857
        %p859 = scmp.lt.s32.totalorder %s38, 1
        %s860 = scalar_select %p859, %s38, 1
        %s861 = smul.addr %s860, 4
        %s862 = smul.addr %s861, 4
        %s863 = scalar_lea.vmem %s9, %s862
        %p864 = scmp.lt.s32.totalorder %s38, 1
        %s865 = scalar_select %p864, %s38, 1
        %s866 = scalar_lea.vmem %s10, %s865
        %p867 = scmp.lt.s32.totalorder %s38, 1
        %s868 = scalar_select %p867, %s38, 1
        %s869 = scalar_lea.vmem %s11, %s868
        %p870 = scmp.lt.s32.totalorder %s38, 1
        %s871 = scalar_select %p870, %s38, 1
        %s872 = scalar_lea.vmem %s12, %s871
        %p873 = scmp.lt.s32.totalorder %s38, 1
        %s874 = scalar_select %p873, %s38, 1
        %s875 = smul.addr %s874, 4
        %s876 = smul.addr %s875, 4
        %s877 = scalar_lea.vmem %s13, %s876
        %p878 = scmp.lt.s32.totalorder %s38, 1
        %s879 = scalar_select %p878, %s38, 1
        %s880 = scalar_lea.vmem %s14, %s879
        %p881 = scmp.lt.s32.totalorder %s38, 1
        %s882 = scalar_select %p881, %s38, 1
        %s883 = smul.addr %s882, 8
        %s884 = smul.addr %s883, 4
        %s885 = scalar_lea.vmem %s15, %s884
        %p886 = scmp.lt.s32.totalorder %s38, 1
        %s887 = scalar_select %p886, %s38, 1
        %s888 = scalar_lea.vmem %s16, %s887
        %p889 = scmp.lt.s32.totalorder %s38, 1
        %s890 = scalar_select %p889, %s38, 1
        %s891 = scalar_lea.vmem %s17, %s890
        %p892 = scmp.lt.s32.totalorder %s38, 1
        %s893 = scalar_select %p892, %s38, 1
        %s894 = scalar_lea.vmem %s18, %s893
        %p896 = scmp.eq.s32.totalorder %s38, 0
        // Predicated region
        $region97: #{tpu_custom_call.1} parent=95 // pred_check
          %p897 = pneg %p896
        $region98: #{tpu_custom_call.1} parent=95 // pred_check_branch
          %899 = sbr.rel (%p897) target = $region100
        $region99: #{tpu_custom_call.1} parent=95 // pred_region
          %v900 = vld [vmem:[%s828] sm:$0xff]
          %vm901 = vcmask 261120
          %902 = vst.msk [vmem:[#allocation2] sm:$0xff] %vm901, %v900
        $region100: #{tpu_custom_call.1} parent=95 // pred_fallthru
          _
        %v903 = vld [vmem:[#allocation2] sm:$0xff]
        %v904 = vpack.c.bf16 %v903, %v903
        %v905 = vld [vmem:[%s836] sm:$0xf]
        %v906 = vld [vmem:[%s836 + $0x4] sm:$0xf]
        %v907 = vld [vmem:[%s836 + $0x8] sm:$0xf]
        %v908 = vld [vmem:[%s836 + $0xc] sm:$0xf]
        %v909 = vld [vmem:[%s836 + $0x10] sm:$0xf]
        %v910 = vld [vmem:[%s836 + $0x14] sm:$0xf]
        %v911 = vld [vmem:[%s836 + $0x18] sm:$0xf]
        %v912 = vld [vmem:[%s836 + $0x1c] sm:$0xf]
        %v913 = vld [vmem:[%s836 + $0x20] sm:$0xf]
        %v914 = vld [vmem:[%s836 + $0x24] sm:$0xf]
        %v915 = vld [vmem:[%s836 + $0x28] sm:$0xf]
        %v916 = vld [vmem:[%s836 + $0x2c] sm:$0xf]
        %v917 = vld [vmem:[%s836 + $0x30] sm:$0xf]
        %v918 = vld [vmem:[%s836 + $0x34] sm:$0xf]
        %v919 = vld [vmem:[%s836 + $0x38] sm:$0xf]
        %v920 = vld [vmem:[%s836 + $0x3c] sm:$0xf]
        %v921 = vld [vmem:[%s850] sm:$0x1]
        %v922 = vld [vmem:[%s850 + $0x1] sm:$0x1]
        %v923 = vld [vmem:[%s850 + $0x2] sm:$0x1]
        %v924 = vld [vmem:[%s850 + $0x3] sm:$0x1]
        %v929 = vperm.slane %v921, 0
        %v930 = vperm.slane %v922, 0
        %v931 = vperm.slane %v923, 0
        %v932 = vperm.slane %v924, 0
        %v941 = vunpack.c.l.b16 %v905
        %v942 = vunpack.c.l.b16 %v906
        %v943 = vunpack.c.l.b16 %v907
        %v944 = vunpack.c.l.b16 %v908
        %v945 = vpack.c.b16 %v942, %v941
        %v946 = vpack.c.b16 %v944, %v943
        %vm949 = vcmask 261120
        %v951 = vsel %vm949, %v904, 0
        %953 = vmatpush.bf16.msra.mxu0 0
        %954 = vmatpush.bf16.msra.mxu0 0
        %955 = vmatpush.bf16.msra.mxu0 0
        %956 = vmatpush.bf16.msra.mxu0 0
        %957 = vmatpush.bf16.msra.mxu0 0
        %958 = vmatpush.bf16.msra.mxu0 0
        %959 = vmatpush.bf16.msra.mxu0 %v946
        %960 = vmatpush.bf16.msra.mxu0 %v945
        %961 = vmatmul.bf16.gmra.mxu0 %v951
        %v962 = vpop.f32.mrf.mxu0
        %v963 = vadd.f32 %v929, %v962
        %v964 = vpop.f32.mrf.mxu0
        %965 = vdwg.mxu0
        %v970 = vunpack.c.l.b16 %v909
        %v971 = vunpack.c.l.b16 %v910
        %v972 = vunpack.c.l.b16 %v911
        %v973 = vunpack.c.l.b16 %v912
        %v974 = vpack.c.b16 %v971, %v970
        %v975 = vpack.c.b16 %v973, %v972
        %978 = vmatpush.bf16.msra.mxu0 0
        %979 = vmatpush.bf16.msra.mxu0 0
        %980 = vmatpush.bf16.msra.mxu0 0
        %981 = vmatpush.bf16.msra.mxu0 0
        %982 = vmatpush.bf16.msra.mxu0 0
        %983 = vmatpush.bf16.msra.mxu0 0
        %984 = vmatpush.bf16.msra.mxu0 %v975
        %985 = vmatpush.bf16.msra.mxu0 %v974
        %986 = vmatmul.bf16.gmra.mxu0 %v951
        %v987 = vpop.f32.mrf.mxu0
        %v988 = vadd.f32 %v930, %v987
        %v989 = vpop.f32.mrf.mxu0
        %990 = vdwg.mxu0
        %v995 = vunpack.c.l.b16 %v913
        %v996 = vunpack.c.l.b16 %v914
        %v997 = vunpack.c.l.b16 %v915
        %v998 = vunpack.c.l.b16 %v916
        %v999 = vpack.c.b16 %v996, %v995
        %v1000 = vpack.c.b16 %v998, %v997
        %1003 = vmatpush.bf16.msra.mxu0 0
        %1004 = vmatpush.bf16.msra.mxu0 0
        %1005 = vmatpush.bf16.msra.mxu0 0
        %1006 = vmatpush.bf16.msra.mxu0 0
        %1007 = vmatpush.bf16.msra.mxu0 0
        %1008 = vmatpush.bf16.msra.mxu0 0
        %1009 = vmatpush.bf16.msra.mxu0 %v1000
        %1010 = vmatpush.bf16.msra.mxu0 %v999
        %1011 = vmatmul.bf16.gmra.mxu0 %v951
        %v1012 = vpop.f32.mrf.mxu0
        %v1013 = vadd.f32 %v931, %v1012
        %v1014 = vpop.f32.mrf.mxu0
        %1015 = vdwg.mxu0
        %v1020 = vunpack.c.l.b16 %v917
        %v1021 = vunpack.c.l.b16 %v918
        %v1022 = vunpack.c.l.b16 %v919
        %v1023 = vunpack.c.l.b16 %v920
        %v1024 = vpack.c.b16 %v1021, %v1020
        %v1025 = vpack.c.b16 %v1023, %v1022
        %1028 = vmatpush.bf16.msra.mxu0 0
        %1029 = vmatpush.bf16.msra.mxu0 0
        %1030 = vmatpush.bf16.msra.mxu0 0
        %1031 = vmatpush.bf16.msra.mxu0 0
        %1032 = vmatpush.bf16.msra.mxu0 0
        %1033 = vmatpush.bf16.msra.mxu0 0
        %1034 = vmatpush.bf16.msra.mxu0 %v1025
        %1035 = vmatpush.bf16.msra.mxu0 %v1024
        %1036 = vmatmul.bf16.gmra.mxu0 %v951
        %v1037 = vpop.f32.mrf.mxu0
        %v1038 = vadd.f32 %v932, %v1037
        %v1039 = vpop.f32.mrf.mxu0
        %1040 = vdwg.mxu0
        %v1041 = vld [vmem:[%s841] sm:$0xf]
        %v1042 = vld [vmem:[%s841 + $0x4] sm:$0xf]
        %v1043 = vld [vmem:[%s841 + $0x8] sm:$0xf]
        %v1044 = vld [vmem:[%s841 + $0xc] sm:$0xf]
        %v1045 = vld [vmem:[%s841 + $0x10] sm:$0xf]
        %v1046 = vld [vmem:[%s841 + $0x14] sm:$0xf]
        %v1047 = vld [vmem:[%s841 + $0x18] sm:$0xf]
        %v1048 = vld [vmem:[%s841 + $0x1c] sm:$0xf]
        %v1049 = vld [vmem:[%s841 + $0x20] sm:$0xf]
        %v1050 = vld [vmem:[%s841 + $0x24] sm:$0xf]
        %v1051 = vld [vmem:[%s841 + $0x28] sm:$0xf]
        %v1052 = vld [vmem:[%s841 + $0x2c] sm:$0xf]
        %v1053 = vld [vmem:[%s841 + $0x30] sm:$0xf]
        %v1054 = vld [vmem:[%s841 + $0x34] sm:$0xf]
        %v1055 = vld [vmem:[%s841 + $0x38] sm:$0xf]
        %v1056 = vld [vmem:[%s841 + $0x3c] sm:$0xf]
        %v1057 = vld [vmem:[%s854] sm:$0x1]
        %v1058 = vld [vmem:[%s854 + $0x1] sm:$0x1]
        %v1059 = vld [vmem:[%s854 + $0x2] sm:$0x1]
        %v1060 = vld [vmem:[%s854 + $0x3] sm:$0x1]
        %v1065 = vperm.slane %v1057, 0
        %v1066 = vperm.slane %v1058, 0
        %v1067 = vperm.slane %v1059, 0
        %v1068 = vperm.slane %v1060, 0
        %v1077 = vunpack.c.l.b16 %v1041
        %v1078 = vunpack.c.l.b16 %v1042
        %v1079 = vunpack.c.l.b16 %v1043
        %v1080 = vunpack.c.l.b16 %v1044
        %v1081 = vpack.c.b16 %v1078, %v1077
        %v1082 = vpack.c.b16 %v1080, %v1079
        %1085 = vmatpush.bf16.msra.mxu0 0
        %1086 = vmatpush.bf16.msra.mxu0 0
        %1087 = vmatpush.bf16.msra.mxu0 0
        %1088 = vmatpush.bf16.msra.mxu0 0
        %1089 = vmatpush.bf16.msra.mxu0 0
        %1090 = vmatpush.bf16.msra.mxu0 0
        %1091 = vmatpush.bf16.msra.mxu0 %v1082
        %1092 = vmatpush.bf16.msra.mxu0 %v1081
        %1093 = vmatmul.bf16.gmra.mxu0 %v951
        %v1094 = vpop.f32.mrf.mxu0
        %v1095 = vadd.f32 %v1065, %v1094
        %v1096 = vpop.f32.mrf.mxu0
        %1097 = vdwg.mxu0
        %v1102 = vunpack.c.l.b16 %v1045
        %v1103 = vunpack.c.l.b16 %v1046
        %v1104 = vunpack.c.l.b16 %v1047
        %v1105 = vunpack.c.l.b16 %v1048
        %v1106 = vpack.c.b16 %v1103, %v1102
        %v1107 = vpack.c.b16 %v1105, %v1104
        %1110 = vmatpush.bf16.msra.mxu0 0
        %1111 = vmatpush.bf16.msra.mxu0 0
        %1112 = vmatpush.bf16.msra.mxu0 0
        %1113 = vmatpush.bf16.msra.mxu0 0
        %1114 = vmatpush.bf16.msra.mxu0 0
        %1115 = vmatpush.bf16.msra.mxu0 0
        %1116 = vmatpush.bf16.msra.mxu0 %v1107
        %1117 = vmatpush.bf16.msra.mxu0 %v1106
        %1118 = vmatmul.bf16.gmra.mxu0 %v951
        %v1119 = vpop.f32.mrf.mxu0
        %v1120 = vadd.f32 %v1066, %v1119
        %v1121 = vpop.f32.mrf.mxu0
        %1122 = vdwg.mxu0
        %v1127 = vunpack.c.l.b16 %v1049
        %v1128 = vunpack.c.l.b16 %v1050
        %v1129 = vunpack.c.l.b16 %v1051
        %v1130 = vunpack.c.l.b16 %v1052
        %v1131 = vpack.c.b16 %v1128, %v1127
        %v1132 = vpack.c.b16 %v1130, %v1129
        %1135 = vmatpush.bf16.msra.mxu0 0
        %1136 = vmatpush.bf16.msra.mxu0 0
        %1137 = vmatpush.bf16.msra.mxu0 0
        %1138 = vmatpush.bf16.msra.mxu0 0
        %1139 = vmatpush.bf16.msra.mxu0 0
        %1140 = vmatpush.bf16.msra.mxu0 0
        %1141 = vmatpush.bf16.msra.mxu0 %v1132
        %1142 = vmatpush.bf16.msra.mxu0 %v1131
        %1143 = vmatmul.bf16.gmra.mxu0 %v951
        %v1144 = vpop.f32.mrf.mxu0
        %v1145 = vadd.f32 %v1067, %v1144
        %v1146 = vpop.f32.mrf.mxu0
        %1147 = vdwg.mxu0
        %v1152 = vunpack.c.l.b16 %v1053
        %v1153 = vunpack.c.l.b16 %v1054
        %v1154 = vunpack.c.l.b16 %v1055
        %v1155 = vunpack.c.l.b16 %v1056
        %v1156 = vpack.c.b16 %v1153, %v1152
        %v1157 = vpack.c.b16 %v1155, %v1154
        %1160 = vmatpush.bf16.msra.mxu0 0
        %1161 = vmatpush.bf16.msra.mxu0 0
        %1162 = vmatpush.bf16.msra.mxu0 0
        %1163 = vmatpush.bf16.msra.mxu0 0
        %1164 = vmatpush.bf16.msra.mxu0 0
        %1165 = vmatpush.bf16.msra.mxu0 0
        %1166 = vmatpush.bf16.msra.mxu0 %v1157
        %1167 = vmatpush.bf16.msra.mxu0 %v1156
        %1168 = vmatmul.bf16.gmra.mxu0 %v951
        %v1169 = vpop.f32.mrf.mxu0
        %v1170 = vadd.f32 %v1068, %v1169
        %v1171 = vpop.f32.mrf.mxu0
        %1172 = vdwg.mxu0
        %v1173 = vld [vmem:[%s846] sm:$0xf]
        %v1174 = vld [vmem:[%s846 + $0x4] sm:$0xf]
        %v1175 = vld [vmem:[%s846 + $0x8] sm:$0xf]
        %v1176 = vld [vmem:[%s846 + $0xc] sm:$0xf]
        %v1177 = vld [vmem:[%s846 + $0x10] sm:$0xf]
        %v1178 = vld [vmem:[%s846 + $0x14] sm:$0xf]
        %v1179 = vld [vmem:[%s846 + $0x18] sm:$0xf]
        %v1180 = vld [vmem:[%s846 + $0x1c] sm:$0xf]
        %v1181 = vld [vmem:[%s846 + $0x20] sm:$0xf]
        %v1182 = vld [vmem:[%s846 + $0x24] sm:$0xf]
        %v1183 = vld [vmem:[%s846 + $0x28] sm:$0xf]
        %v1184 = vld [vmem:[%s846 + $0x2c] sm:$0xf]
        %v1185 = vld [vmem:[%s846 + $0x30] sm:$0xf]
        %v1186 = vld [vmem:[%s846 + $0x34] sm:$0xf]
        %v1187 = vld [vmem:[%s846 + $0x38] sm:$0xf]
        %v1188 = vld [vmem:[%s846 + $0x3c] sm:$0xf]
        %v1189 = vld [vmem:[%s858] sm:$0x1]
        %v1190 = vld [vmem:[%s858 + $0x1] sm:$0x1]
        %v1191 = vld [vmem:[%s858 + $0x2] sm:$0x1]
        %v1192 = vld [vmem:[%s858 + $0x3] sm:$0x1]
        %v1197 = vperm.slane %v1189, 0
        %v1198 = vperm.slane %v1190, 0
        %v1199 = vperm.slane %v1191, 0
        %v1200 = vperm.slane %v1192, 0
        %v1209 = vunpack.c.l.b16 %v1173
        %v1210 = vunpack.c.l.b16 %v1174
        %v1211 = vunpack.c.l.b16 %v1175
        %v1212 = vunpack.c.l.b16 %v1176
        %v1213 = vpack.c.b16 %v1210, %v1209
        %v1214 = vpack.c.b16 %v1212, %v1211
        %1217 = vmatpush.bf16.msra.mxu0 0
        %1218 = vmatpush.bf16.msra.mxu0 0
        %1219 = vmatpush.bf16.msra.mxu0 0
        %1220 = vmatpush.bf16.msra.mxu0 0
        %1221 = vmatpush.bf16.msra.mxu0 0
        %1222 = vmatpush.bf16.msra.mxu0 0
        %1223 = vmatpush.bf16.msra.mxu0 %v1214
        %1224 = vmatpush.bf16.msra.mxu0 %v1213
        %1225 = vmatmul.bf16.gmra.mxu0 %v951
        %v1226 = vpop.f32.mrf.mxu0
        %v1227 = vadd.f32 %v1197, %v1226
        %v1228 = vpop.f32.mrf.mxu0
        %1229 = vdwg.mxu0
        %v1234 = vunpack.c.l.b16 %v1177
        %v1235 = vunpack.c.l.b16 %v1178
        %v1236 = vunpack.c.l.b16 %v1179
        %v1237 = vunpack.c.l.b16 %v1180
        %v1238 = vpack.c.b16 %v1235, %v1234
        %v1239 = vpack.c.b16 %v1237, %v1236
        %1242 = vmatpush.bf16.msra.mxu0 0
        %1243 = vmatpush.bf16.msra.mxu0 0
        %1244 = vmatpush.bf16.msra.mxu0 0
        %1245 = vmatpush.bf16.msra.mxu0 0
        %1246 = vmatpush.bf16.msra.mxu0 0
        %1247 = vmatpush.bf16.msra.mxu0 0
        %1248 = vmatpush.bf16.msra.mxu0 %v1239
        %1249 = vmatpush.bf16.msra.mxu0 %v1238
        %1250 = vmatmul.bf16.gmra.mxu0 %v951
        %v1251 = vpop.f32.mrf.mxu0
        %v1252 = vadd.f32 %v1198, %v1251
        %v1253 = vpop.f32.mrf.mxu0
        %1254 = vdwg.mxu0
        %v1259 = vunpack.c.l.b16 %v1181
        %v1260 = vunpack.c.l.b16 %v1182
        %v1261 = vunpack.c.l.b16 %v1183
        %v1262 = vunpack.c.l.b16 %v1184
        %v1263 = vpack.c.b16 %v1260, %v1259
        %v1264 = vpack.c.b16 %v1262, %v1261
        %1267 = vmatpush.bf16.msra.mxu0 0
        %1268 = vmatpush.bf16.msra.mxu0 0
        %1269 = vmatpush.bf16.msra.mxu0 0
        %1270 = vmatpush.bf16.msra.mxu0 0
        %1271 = vmatpush.bf16.msra.mxu0 0
        %1272 = vmatpush.bf16.msra.mxu0 0
        %1273 = vmatpush.bf16.msra.mxu0 %v1264
        %1274 = vmatpush.bf16.msra.mxu0 %v1263
        %1275 = vmatmul.bf16.gmra.mxu0 %v951
        %v1276 = vpop.f32.mrf.mxu0
        %v1277 = vadd.f32 %v1199, %v1276
        %v1278 = vpop.f32.mrf.mxu0
        %1279 = vdwg.mxu0
        %v1284 = vunpack.c.l.b16 %v1185
        %v1285 = vunpack.c.l.b16 %v1186
        %v1286 = vunpack.c.l.b16 %v1187
        %v1287 = vunpack.c.l.b16 %v1188
        %v1288 = vpack.c.b16 %v1285, %v1284
        %v1289 = vpack.c.b16 %v1287, %v1286
        %1292 = vmatpush.bf16.msra.mxu0 0
        %1293 = vmatpush.bf16.msra.mxu0 0
        %1294 = vmatpush.bf16.msra.mxu0 0
        %1295 = vmatpush.bf16.msra.mxu0 0
        %1296 = vmatpush.bf16.msra.mxu0 0
        %1297 = vmatpush.bf16.msra.mxu0 0
        %1298 = vmatpush.bf16.msra.mxu0 %v1289
        %1299 = vmatpush.bf16.msra.mxu0 %v1288
        %1300 = vmatmul.bf16.gmra.mxu0 %v951
        %v1301 = vpop.f32.mrf.mxu0
        %v1302 = vadd.f32 %v1200, %v1301
        %v1303 = vpop.f32.mrf.mxu0
        %1304 = vdwg.mxu0
        %v1305 = vpack.c.bf16 %v963, %v963
        %v1306 = vpack.c.bf16 %v988, %v988
        %v1307 = vpack.c.bf16 %v1013, %v1013
        %v1308 = vpack.c.bf16 %v1038, %v1038
        %v1309 = vpack.c.bf16 %v1095, %v1095
        %v1310 = vpack.c.bf16 %v1120, %v1120
        %v1311 = vpack.c.bf16 %v1145, %v1145
        %v1312 = vpack.c.bf16 %v1170, %v1170
        %v1313 = vld [vmem:[%s2] sm:$0xff]
        %v1314 = vld [vmem:[%s2 + $0x8] sm:$0xff]
        %v1315 = vld [vmem:[%s2 + $0x10] sm:$0xff]
        %v1316 = vld [vmem:[%s2 + $0x18] sm:$0xff]
        %vm1317 = vcmask 64512
        %v1319 = vsel %vm1317, %v1305, 0
        %v1322 = vsel %vm1317, %v1309, 0
        %1324 = vmatpush.bf16.xpose.msra.mxu0 0
        %1325 = vmatpush.bf16.xpose.msra.mxu0 0
        %1326 = vmatpush.bf16.xpose.msra.mxu0 0
        %1327 = vmatpush.bf16.xpose.msra.mxu0 0
        %1328 = vmatpush.bf16.xpose.msra.mxu0 0
        %1329 = vmatpush.bf16.xpose.msra.mxu0 0
        %1330 = vmatpush.bf16.xpose.msra.mxu0 0
        %1331 = vmatpush.bf16.xpose.msra.mxu0 %v1322
        %1332 = vmatmul.bf16.gmra.mxu0 %v1319
        %v1333 = vpop.f32.mrf.mxu0
        %v1334 = vadd.f32 %v1313, %v1333
        %v1335 = vpop.f32.mrf.mxu0
        %1336 = vdwg.mxu0
        %v1338 = vsel %vm1317, %v1306, 0
        %v1341 = vsel %vm1317, %v1310, 0
        %1343 = vmatpush.bf16.xpose.msra.mxu0 0
        %1344 = vmatpush.bf16.xpose.msra.mxu0 0
        %1345 = vmatpush.bf16.xpose.msra.mxu0 0
        %1346 = vmatpush.bf16.xpose.msra.mxu0 0
        %1347 = vmatpush.bf16.xpose.msra.mxu0 0
        %1348 = vmatpush.bf16.xpose.msra.mxu0 0
        %1349 = vmatpush.bf16.xpose.msra.mxu0 0
        %1350 = vmatpush.bf16.xpose.msra.mxu0 %v1341
        %1351 = vmatmul.bf16.gmra.mxu0 %v1338
        %v1352 = vpop.f32.mrf.mxu0
        %v1353 = vadd.f32 %v1314, %v1352
        %v1354 = vpop.f32.mrf.mxu0
        %1355 = vdwg.mxu0
        %v1357 = vsel %vm1317, %v1307, 0
        %v1360 = vsel %vm1317, %v1311, 0
        %1362 = vmatpush.bf16.xpose.msra.mxu0 0
        %1363 = vmatpush.bf16.xpose.msra.mxu0 0
        %1364 = vmatpush.bf16.xpose.msra.mxu0 0
        %1365 = vmatpush.bf16.xpose.msra.mxu0 0
        %1366 = vmatpush.bf16.xpose.msra.mxu0 0
        %1367 = vmatpush.bf16.xpose.msra.mxu0 0
        %1368 = vmatpush.bf16.xpose.msra.mxu0 0
        %1369 = vmatpush.bf16.xpose.msra.mxu0 %v1360
        %1370 = vmatmul.bf16.gmra.mxu0 %v1357
        %v1371 = vpop.f32.mrf.mxu0
        %v1372 = vadd.f32 %v1315, %v1371
        %v1373 = vpop.f32.mrf.mxu0
        %1374 = vdwg.mxu0
        %v1376 = vsel %vm1317, %v1308, 0
        %v1379 = vsel %vm1317, %v1312, 0
        %1381 = vmatpush.bf16.xpose.msra.mxu0 0
        %1382 = vmatpush.bf16.xpose.msra.mxu0 0
        %1383 = vmatpush.bf16.xpose.msra.mxu0 0
        %1384 = vmatpush.bf16.xpose.msra.mxu0 0
        %1385 = vmatpush.bf16.xpose.msra.mxu0 0
        %1386 = vmatpush.bf16.xpose.msra.mxu0 0
        %1387 = vmatpush.bf16.xpose.msra.mxu0 0
        %1388 = vmatpush.bf16.xpose.msra.mxu0 %v1379
        %1389 = vmatmul.bf16.gmra.mxu0 %v1376
        %v1390 = vpop.f32.mrf.mxu0
        %v1391 = vadd.f32 %v1316, %v1390
        %v1392 = vpop.f32.mrf.mxu0
        %1393 = vdwg.mxu0
        %v1394 = vld [vmem:[%s831] sm:$0x1]
        %v1396 = vperm.slane %v1394, 0
        %v1398 = vadd.f32 %v1334, %v1396
        %v1399 = vadd.f32 %v1353, %v1396
        %v1400 = vadd.f32 %v1372, %v1396
        %v1401 = vadd.f32 %v1391, %v1396
        %v1402 = vsel %vm1317, %v1398, -inf
        %1403 = vmax.xlane.f32.xlu0 %v1402
        %v1404 = vpop.xlane.xlu0 %1403
        %v1405 = vsel %vm1317, %v1399, -inf
        %1406 = vmax.xlane.f32.xlu0 %v1405
        %v1407 = vpop.xlane.xlu0 %1406
        %v1408 = vsel %vm1317, %v1400, -inf
        %1409 = vmax.xlane.f32.xlu0 %v1408
        %v1410 = vpop.xlane.xlu0 %1409
        %v1411 = vsel %vm1317, %v1401, -inf
        %1412 = vmax.xlane.f32.xlu0 %v1411
        %v1413 = vpop.xlane.xlu0 %1412
        %v1414 = vsub.f32 %v1398, %v1404
        %v1415 = vsub.f32 %v1399, %v1407
        %v1416 = vsub.f32 %v1400, %v1410
        %v1417 = vsub.f32 %v1401, %v1413
        %v1418 = vmul.f32 %v1414, 1.442695
        %v1419 = vpow.pop %v1418
        %v1420 = vmul.f32 %v1415, 1.442695
        %v1421 = vpow.pop %v1420
        %v1422 = vmul.f32 %v1416, 1.442695
        %v1423 = vpow.pop %v1422
        %v1424 = vmul.f32 %v1417, 1.442695
        %v1425 = vpow.pop %v1424
        %v1426 = vsel %vm1317, %v1419, 0.0
        %1427 = vadd.xlane.f32.xlu0 %v1426
        %v1428 = vpop.xlane.xlu0 %1427
        %v1429 = vsel %vm1317, %v1421, 0.0
        %1430 = vadd.xlane.f32.xlu0 %v1429
        %v1431 = vpop.xlane.xlu0 %1430
        %v1432 = vsel %vm1317, %v1423, 0.0
        %1433 = vadd.xlane.f32.xlu0 %v1432
        %v1434 = vpop.xlane.xlu0 %1433
        %v1435 = vsel %vm1317, %v1425, 0.0
        %1436 = vadd.xlane.f32.xlu0 %v1435
        %v1437 = vpop.xlane.xlu0 %1436
        %v1438 = vrcp.pop %v1428
        %v1439 = vrcp.pop %v1431
        %v1440 = vrcp.pop %v1434
        %v1441 = vrcp.pop %v1437
        %v1442 = vmul.f32 %v1419, %v1438
        %v1443 = vmul.f32 %v1421, %v1439
        %v1444 = vmul.f32 %v1423, %v1440
        %v1445 = vmul.f32 %v1425, %v1441
        %v1446 = vpack.c.bf16 %v1442, %v1442
        %v1447 = vpack.c.bf16 %v1443, %v1443
        %v1448 = vpack.c.bf16 %v1444, %v1444
        %v1449 = vpack.c.bf16 %v1445, %v1445
        %v1450 = vpack.c.bf16 %v1227, %v1227
        %v1451 = vpack.c.bf16 %v1252, %v1252
        %v1452 = vpack.c.bf16 %v1277, %v1277
        %v1453 = vpack.c.bf16 %v1302, %v1302
        %v1455 = vsel %vm1317, %v1446, 0
        %vm1457 = vcmask 1043456
        %v1459 = vsel %vm1457, %v1450, 0
        %1461 = vmatpush.bf16.msra.mxu0 0
        %1462 = vmatpush.bf16.msra.mxu0 0
        %1463 = vmatpush.bf16.msra.mxu0 0
        %1464 = vmatpush.bf16.msra.mxu0 0
        %1465 = vmatpush.bf16.msra.mxu0 0
        %1466 = vmatpush.bf16.msra.mxu0 0
        %1467 = vmatpush.bf16.msra.mxu0 0
        %1468 = vmatpush.bf16.msra.mxu0 %v1459
        %1469 = vmatmul.bf16.gmra.mxu0 %v1455
        %v1470 = vpop.f32.mrf.mxu0
        %v1471 = vadd.f32 0.0, %v1470
        %v1472 = vpop.f32.mrf.mxu0
        %1473 = vdwg.mxu0
        %v1475 = vsel %vm1317, %v1447, 0
        %v1478 = vsel %vm1457, %v1451, 0
        %1480 = vmatpush.bf16.msra.mxu0 0
        %1481 = vmatpush.bf16.msra.mxu0 0
        %1482 = vmatpush.bf16.msra.mxu0 0
        %1483 = vmatpush.bf16.msra.mxu0 0
        %1484 = vmatpush.bf16.msra.mxu0 0
        %1485 = vmatpush.bf16.msra.mxu0 0
        %1486 = vmatpush.bf16.msra.mxu0 0
        %1487 = vmatpush.bf16.msra.mxu0 %v1478
        %1488 = vmatmul.bf16.gmra.mxu0 %v1475
        %v1489 = vpop.f32.mrf.mxu0
        %v1490 = vadd.f32 0.0, %v1489
        %v1491 = vpop.f32.mrf.mxu0
        %1492 = vdwg.mxu0
        %v1494 = vsel %vm1317, %v1448, 0
        %v1497 = vsel %vm1457, %v1452, 0
        %1499 = vmatpush.bf16.msra.mxu0 0
        %1500 = vmatpush.bf16.msra.mxu0 0
        %1501 = vmatpush.bf16.msra.mxu0 0
        %1502 = vmatpush.bf16.msra.mxu0 0
        %1503 = vmatpush.bf16.msra.mxu0 0
        %1504 = vmatpush.bf16.msra.mxu0 0
        %1505 = vmatpush.bf16.msra.mxu0 0
        %1506 = vmatpush.bf16.msra.mxu0 %v1497
        %1507 = vmatmul.bf16.gmra.mxu0 %v1494
        %v1508 = vpop.f32.mrf.mxu0
        %v1509 = vadd.f32 0.0, %v1508
        %v1510 = vpop.f32.mrf.mxu0
        %1511 = vdwg.mxu0
        %v1513 = vsel %vm1317, %v1449, 0
        %v1516 = vsel %vm1457, %v1453, 0
        %1518 = vmatpush.bf16.msra.mxu0 0
        %1519 = vmatpush.bf16.msra.mxu0 0
        %1520 = vmatpush.bf16.msra.mxu0 0
        %1521 = vmatpush.bf16.msra.mxu0 0
        %1522 = vmatpush.bf16.msra.mxu0 0
        %1523 = vmatpush.bf16.msra.mxu0 0
        %1524 = vmatpush.bf16.msra.mxu0 0
        %1525 = vmatpush.bf16.msra.mxu0 %v1516
        %1526 = vmatmul.bf16.gmra.mxu0 %v1513
        %v1527 = vpop.f32.mrf.mxu0
        %v1528 = vadd.f32 0.0, %v1527
        %v1529 = vpop.f32.mrf.mxu0
        %1530 = vdwg.mxu0
        %v1531 = vpack.c.bf16 %v1471, %v1471
        %v1532 = vpack.c.bf16 %v1490, %v1490
        %v1533 = vpack.c.bf16 %v1509, %v1509
        %v1534 = vpack.c.bf16 %v1528, %v1528
        %v1535 = vld [vmem:[%s863] sm:$0xf]
        %v1536 = vld [vmem:[%s863 + $0x4] sm:$0xf]
        %v1537 = vld [vmem:[%s863 + $0x8] sm:$0xf]
        %v1538 = vld [vmem:[%s863 + $0xc] sm:$0xf]
        %v1540 = vsel %vm1317, %v1531, 0
        %v1543 = vsel %vm1457, %v1535, 0
        %1545 = vmatpush.bf16.msra.mxu0 0
        %1546 = vmatpush.bf16.msra.mxu0 0
        %1547 = vmatpush.bf16.msra.mxu0 0
        %1548 = vmatpush.bf16.msra.mxu0 0
        %1549 = vmatpush.bf16.msra.mxu0 0
        %1550 = vmatpush.bf16.msra.mxu0 0
        %1551 = vmatpush.bf16.msra.mxu0 0
        %1552 = vmatpush.bf16.msra.mxu0 %v1543
        %1553 = vmatmul.bf16.gmra.mxu0 %v1540
        %v1554 = vpop.f32.mrf.mxu0
        %v1555 = vadd.f32 0.0, %v1554
        %v1556 = vpop.f32.mrf.mxu0
        %1557 = vdwg.mxu0
        %v1559 = vsel %vm1317, %v1532, 0
        %v1562 = vsel %vm1457, %v1536, 0
        %1564 = vmatpush.bf16.msra.mxu0 0
        %1565 = vmatpush.bf16.msra.mxu0 0
        %1566 = vmatpush.bf16.msra.mxu0 0
        %1567 = vmatpush.bf16.msra.mxu0 0
        %1568 = vmatpush.bf16.msra.mxu0 0
        %1569 = vmatpush.bf16.msra.mxu0 0
        %1570 = vmatpush.bf16.msra.mxu0 0
        %1571 = vmatpush.bf16.msra.mxu0 %v1562
        %1572 = vmatmul.bf16.gmra.mxu0 %v1559
        %v1573 = vpop.f32.mrf.mxu0
        %v1574 = vadd.f32 0.0, %v1573
        %v1575 = vpop.f32.mrf.mxu0
        %1576 = vdwg.mxu0
        %v1578 = vsel %vm1317, %v1533, 0
        %v1581 = vsel %vm1457, %v1537, 0
        %1583 = vmatpush.bf16.msra.mxu0 0
        %1584 = vmatpush.bf16.msra.mxu0 0
        %1585 = vmatpush.bf16.msra.mxu0 0
        %1586 = vmatpush.bf16.msra.mxu0 0
        %1587 = vmatpush.bf16.msra.mxu0 0
        %1588 = vmatpush.bf16.msra.mxu0 0
        %1589 = vmatpush.bf16.msra.mxu0 0
        %1590 = vmatpush.bf16.msra.mxu0 %v1581
        %1591 = vmatmul.bf16.gmra.mxu0 %v1578
        %v1592 = vpop.f32.mrf.mxu0
        %v1593 = vadd.f32 0.0, %v1592
        %v1594 = vpop.f32.mrf.mxu0
        %1595 = vdwg.mxu0
        %v1597 = vsel %vm1317, %v1534, 0
        %v1600 = vsel %vm1457, %v1538, 0
        %1602 = vmatpush.bf16.msra.mxu0 0
        %1603 = vmatpush.bf16.msra.mxu0 0
        %1604 = vmatpush.bf16.msra.mxu0 0
        %1605 = vmatpush.bf16.msra.mxu0 0
        %1606 = vmatpush.bf16.msra.mxu0 0
        %1607 = vmatpush.bf16.msra.mxu0 0
        %1608 = vmatpush.bf16.msra.mxu0 0
        %1609 = vmatpush.bf16.msra.mxu0 %v1600
        %1610 = vmatmul.bf16.gmra.mxu0 %v1597
        %v1611 = vpop.f32.mrf.mxu0
        %v1612 = vadd.f32 0.0, %v1611
        %v1613 = vpop.f32.mrf.mxu0
        %1614 = vdwg.mxu0
        %v1615 = vsel %vm949, %v1555, 0.0
        %v1616 = vsel %vm949, %v1574, 0.0
        %v1617 = vadd.f32 %v1615, %v1616
        %v1618 = vsel %vm949, %v1593, 0.0
        %v1619 = vadd.f32 %v1617, %v1618
        %v1620 = vsel %vm949, %v1612, 0.0
        %v1621 = vadd.f32 %v1619, %v1620
        %v1622 = vld [vmem:[%s866] sm:$0x1]
        %v1624 = vperm.slane %v1622, 0
        %v1626 = vadd.f32 %v1621, %v1624
        %v1627 = vadd.f32 %v1626, %v903
        %v1628 = vld [vmem:[%s869] sm:$0x1]
        %v1629 = vld [vmem:[%s872] sm:$0x1]
        %v1630 = vsel %vm949, %v1627, 0.0
        %1631 = vadd.xlane.f32.xlu0 %v1630
        %v1632 = vpop.xlane.xlu0 %1631
        %v1633 = vrcp.pop 32.0
        %v1634 = vmul.f32 32.0, %v1633
        %v1635 = vsub.f32 1.0, %v1634
        %v1636 = vmul.f32 %v1633, %v1635
        %v1637 = vadd.f32 %v1633, %v1636
        %vm1638 = vweird.f32 %v1633
        %v1639 = vsel %vm1638, %v1633, %v1637
        %v1640 = vmul.f32 %v1632, %v1639
        %v1641 = vsub.f32 %v1627, %v1640
        %v1642 = vmul.f32 %v1641, %v1641
        %v1643 = vsel %vm949, %v1642, 0.0
        %1644 = vadd.xlane.f32.xlu0 %v1643
        %v1645 = vpop.xlane.xlu0 %1644
        %v1646 = vmul.f32 %v1645, %v1639
        %v1647 = vadd.f32 %v1646, 1e-05
        %v1648 = vrsqrt.pop %v1647
        %v1649 = vmul.f32 %v1648, %v1647
        %v1650 = vmul.f32 %v1649, %v1648
        %v1651 = vmul.f32 0.5, %v1650
        %v1652 = vsub.f32 1.5, %v1651
        %v1653 = vmul.f32 %v1648, %v1652
        %vm1654 = vweird.f32 %v1647
        %vm1655 = vweird.f32 %v1648
        %vm1656 = vmor %vm1654, %vm1655
        %v1657 = vsel %vm1656, %v1648, %v1653
        %v1658 = vmul.f32 %v1641, %v1657
        %v1660 = vperm.slane %v1628, 0
        %v1662 = vmul.f32 %v1658, %v1660
        %v1664 = vperm.slane %v1629, 0
        %v1666 = vadd.f32 %v1662, %v1664
        %v1667 = vld [vmem:[%s877] sm:$0xf]
        %v1668 = vld [vmem:[%s877 + $0x4] sm:$0xf]
        %v1669 = vld [vmem:[%s877 + $0x8] sm:$0xf]
        %v1670 = vld [vmem:[%s877 + $0xc] sm:$0xf]
        %v1671 = vpack.c.bf16 %v1666, %v1666
        %v1672 = vld [vmem:[%s880] sm:$0x1]
        %v1674 = vperm.slane %v1672, 0
        %v1680 = vunpack.c.l.b16 %v1667
        %v1681 = vunpack.c.l.b16 %v1668
        %v1682 = vunpack.c.l.b16 %v1669
        %v1683 = vunpack.c.l.b16 %v1670
        %v1684 = vpack.c.b16 %v1681, %v1680
        %v1685 = vpack.c.b16 %v1683, %v1682
        %v1689 = vsel %vm949, %v1671, 0
        %1691 = vmatpush.bf16.msra.mxu0 0
        %1692 = vmatpush.bf16.msra.mxu0 0
        %1693 = vmatpush.bf16.msra.mxu0 0
        %1694 = vmatpush.bf16.msra.mxu0 0
        %1695 = vmatpush.bf16.msra.mxu0 0
        %1696 = vmatpush.bf16.msra.mxu0 0
        %1697 = vmatpush.bf16.msra.mxu0 %v1685
        %1698 = vmatpush.bf16.msra.mxu0 %v1684
        %1699 = vmatmul.bf16.gmra.mxu0 %v1689
        %v1700 = vpop.f32.mrf.mxu0
        %v1701 = vadd.f32 %v1674, %v1700
        %v1702 = vpop.f32.mrf.mxu0
        %1703 = vdwg.mxu0
        %v1704 = vmul.f32 %v1701, 0.5
        %v1705 = vrcp.pop 1.4142135
        %v1706 = vmul.f32 1.4142135, %v1705
        %v1707 = vsub.f32 1.0, %v1706
        %v1708 = vmul.f32 %v1705, %v1707
        %v1709 = vadd.f32 %v1705, %v1708
        %vm1710 = vweird.f32 %v1705
        %v1711 = vsel %vm1710, %v1705, %v1709
        %v1712 = vmul.f32 %v1701, %v1711
        %v1713 = vmul.f32 %v1712, %v1712
        %v1714 = vmin.f32 16.0, %v1713
        %v1715 = vmul.f32 %v1714, 2.1237322e-06
        %v1716 = vadd.f32 %v1715, 0.00028619796
        %v1717 = vmul.f32 %v1714, %v1716
        %v1718 = vadd.f32 %v1717, 0.0036580483
        %v1719 = vmul.f32 %v1714, %v1718
        %v1720 = vadd.f32 %v1719, 0.05243302
        %v1721 = vmul.f32 %v1714, %v1720
        %v1722 = vadd.f32 %v1721, 0.18741608
        %v1723 = vmul.f32 %v1714, %v1722
        %v1724 = vadd.f32 %v1723, 1.1283791
        %v1725 = vmul.f32 %v1712, %v1724
        %v1726 = vmul.f32 %v1714, 3.8918573e-05
        %v1727 = vadd.f32 %v1726, 0.001143296
        %v1728 = vmul.f32 %v1714, %v1727
        %v1729 = vadd.f32 %v1728, 0.014752088
        %v1730 = vmul.f32 %v1714, %v1729
        %v1731 = vadd.f32 %v1730, 0.112945676
        %v1732 = vmul.f32 %v1714, %v1731
        %v1733 = vadd.f32 %v1732, 0.4994258
        %v1734 = vmul.f32 %v1714, %v1733
        %v1735 = vadd.f32 %v1734, 1.0
        %v1736 = vrcp.pop %v1735
        %v1737 = vmul.f32 %v1735, %v1736
        %v1738 = vsub.f32 1.0, %v1737
        %v1739 = vmul.f32 %v1736, %v1738
        %v1740 = vadd.f32 %v1736, %v1739
        %vm1741 = vweird.f32 %v1735
        %vm1742 = vweird.f32 %v1736
        %vm1743 = vmor %vm1741, %vm1742
        %v1744 = vsel %vm1743, %v1736, %v1740
        %v1745 = vand.u32 2147483647, %v1735
        %vm1746 = vcmp.eq.f32.partialorder %v1745, 8.507059e+37
        %v1747 = vand.u32 %v1735, 2147483648
        %v1748 = vor.u32 1.1754944e-38, %v1747
        %v1749 = vsel %vm1746, %v1748, %v1744
        %v1750 = vmul.f32 %v1725, %v1749
        %v1751 = vmin.f32 %v1750, 1.0
        %v1752 = vmax.f32 %v1751, -1.0
        %v1753 = vadd.f32 %v1752, 1.0
        %v1754 = vmul.f32 %v1704, %v1753
        %v1755 = vld [vmem:[%s885] sm:$0xf]
        %v1756 = vld [vmem:[%s885 + $0x4] sm:$0xf]
        %v1757 = vld [vmem:[%s885 + $0x8] sm:$0xf]
        %v1758 = vld [vmem:[%s885 + $0xc] sm:$0xf]
        %v1759 = vld [vmem:[%s885 + $0x10] sm:$0xf]
        %v1760 = vld [vmem:[%s885 + $0x14] sm:$0xf]
        %v1761 = vld [vmem:[%s885 + $0x18] sm:$0xf]
        %v1762 = vld [vmem:[%s885 + $0x1c] sm:$0xf]
        %v1763 = vpack.c.bf16 %v1754, %v1754
        %v1764 = vld [vmem:[%s888] sm:$0x1]
        %v1766 = vperm.slane %v1764, 0
        %v1776 = vunpack.c.l.b16 %v1755
        %v1777 = vunpack.c.l.b16 %v1756
        %v1778 = vunpack.c.l.b16 %v1757
        %v1779 = vunpack.c.l.b16 %v1758
        %v1780 = vunpack.c.l.b16 %v1759
        %v1781 = vunpack.c.l.b16 %v1760
        %v1782 = vunpack.c.l.b16 %v1761
        %v1783 = vunpack.c.l.b16 %v1762
        %v1784 = vpack.c.b16 %v1777, %v1776
        %v1785 = vpack.c.b16 %v1779, %v1778
        %v1786 = vpack.c.b16 %v1781, %v1780
        %v1787 = vpack.c.b16 %v1783, %v1782
        %vm1792 = vcmask 523264
        %v1794 = vsel %vm1792, %v1763, 0
        %1796 = vmatpush.bf16.msra.mxu0 0
        %1797 = vmatpush.bf16.msra.mxu0 0
        %1798 = vmatpush.bf16.msra.mxu0 0
        %1799 = vmatpush.bf16.msra.mxu0 0
        %1800 = vmatpush.bf16.msra.mxu0 %v1787
        %1801 = vmatpush.bf16.msra.mxu0 %v1786
        %1802 = vmatpush.bf16.msra.mxu0 %v1785
        %1803 = vmatpush.bf16.msra.mxu0 %v1784
        %1804 = vmatmul.bf16.gmra.mxu0 %v1794
        %v1805 = vpop.f32.mrf.mxu0
        %v1806 = vadd.f32 %v1766, %v1805
        %v1807 = vpop.f32.mrf.mxu0
        %1808 = vdwg.mxu0
        %v1809 = vadd.f32 %v1806, %v1666
        %v1810 = vld [vmem:[%s891] sm:$0x1]
        %v1811 = vld [vmem:[%s894] sm:$0x1]
        %v1812 = vsel %vm949, %v1809, 0.0
        %1813 = vadd.xlane.f32.xlu0 %v1812
        %v1814 = vpop.xlane.xlu0 %1813
        %v1815 = vmul.f32 %v1814, %v1639
        %v1816 = vsub.f32 %v1809, %v1815
        %v1817 = vmul.f32 %v1816, %v1816
        %v1818 = vsel %vm949, %v1817, 0.0
        %1819 = vadd.xlane.f32.xlu0 %v1818
        %v1820 = vpop.xlane.xlu0 %1819
        %v1821 = vmul.f32 %v1820, %v1639
        %v1822 = vadd.f32 %v1821, 1e-05
        %v1823 = vrsqrt.pop %v1822
        %v1824 = vmul.f32 %v1823, %v1822
        %v1825 = vmul.f32 %v1824, %v1823
        %v1826 = vmul.f32 0.5, %v1825
        %v1827 = vsub.f32 1.5, %v1826
        %v1828 = vmul.f32 %v1823, %v1827
        %vm1829 = vweird.f32 %v1822
        %vm1830 = vweird.f32 %v1823
        %vm1831 = vmor %vm1829, %vm1830
        %v1832 = vsel %vm1831, %v1823, %v1828
        %v1833 = vmul.f32 %v1816, %v1832
        %v1835 = vperm.slane %v1810, 0
        %v1837 = vmul.f32 %v1833, %v1835
        %v1839 = vperm.slane %v1811, 0
        %v1841 = vadd.f32 %v1837, %v1839
        %1842 = vst.msk [vmem:[#allocation2] sm:$0xff] %vm949, %v1841
        %1843 = vst.msk [vmem:[%s824] sm:$0xff] %vm949, %v1841
        %s1844 = sand.u32 %s544, 1
        %s1845 = scalar_lea.sflag [#allocation4], %s1844
        %s1846 = sand.u32 %s544, 1
        %s1847 = smul.addr %s1846, 8
        %s1848 = scalar_lea.vmem [#allocation3], %s1847
        // Predicated region
        $region101: #{tpu_custom_call.1} parent=95 // pred_check
          %p1849 = pneg %p554
        $region102: #{tpu_custom_call.1} parent=95 // pred_check_branch
          %1851 = sbr.rel (%p1849) target = $region104
        $region103: #{tpu_custom_call.1} parent=95 // pred_region
          %1853 = vsyncadd %s1845, 0
          %s1854 = smul.addr %s38, 2
          %s1855 = sadd.s32 %s37, %s1854
          %s1856 = smul.addr %s1855, 8
          %s1857 = scalar_lea.hbm %s19, %s1856
          %s1859 = sshll.u32 %s1848, 4
          %s1860 = int_to_ptr.vmem [resolvable:$true] %s1859
          %s1861 = sshll.u32 %s1857, 4
          %s1862 = int_to_ptr.hbm [resolvable:$true] %s1861
          %1864 = dma.vmem_to_hbm [thread:$0]  %s1860, 128, %s1862, %s1845
        $region104: #{tpu_custom_call.1} parent=95 // pred_fallthru
          _
      $region96: #{tpu_custom_call.1} parent=5 // pred_fallthru
        _
      %p1865 = scmp.le.s32.totalorder 2, %s28
      // Predicated region
      $region105: #{tpu_custom_call.1} parent=5 // pred_check
        %p1866 = pneg %p1865
      $region106: #{tpu_custom_call.1} parent=5 // pred_check_branch
        %1868 = sbr.rel (%p1866) target = $region108
      $region107: #{tpu_custom_call.1} parent=5 // pred_region
        %s1869 = ssub.s32 %s28, 2
        // Predicated region
        $region109: #{tpu_custom_call.1} parent=107 // pred_check
          %p1870 = pneg %p560
        $region110: #{tpu_custom_call.1} parent=107 // pred_check_branch
          %1872 = sbr.rel (%p1870) target = $region112
        $region111: #{tpu_custom_call.1} parent=107 // pred_region
          %s1873 = sand.u32 %s545, 1
          %s1874 = scalar_lea.sflag [#allocation4], %s1873
          %s1875 = sand.u32 %s545, 1
          %s1876 = smul.addr %s1875, 8
          %s1877 = scalar_lea.vmem [#allocation3], %s1876
          %1879 = dma.done %s1874, 128
        $region112: #{tpu_custom_call.1} parent=107 // pred_fallthru
          _
      $region108: #{tpu_custom_call.1} parent=5 // pred_fallthru
        _
    $region6: #{tpu_custom_call.1} parent=1 // loop_footer
      %s32 = sadd.s32 1, %s28
    $region7: #{tpu_custom_call.1} parent=1 // loop_footer_branch
      %27 = sbr.rel target = $region3
    $region8: #{tpu_custom_call.1} parent=1 // loop_exit
      _
    %1880 = vsyncpa [#allocation4], 1
    %s1881 = scalar_lea.sflag [#allocation4], 1
    %1882 = vsyncpa %s1881, 1

</llo_original>
